<compile_context>
chip_gen: v5e
topology: v5e:2x2
jax: 0.10.0
libtpu: 0.0.40
codegen_flags: <defaults>
</compile_context>

<pallas_src>
import functools
import math

import jax
import jax.numpy as jnp
from jax.experimental import pallas as pl
from jax.experimental.pallas import tpu as pltpu


LANE = 128  # classifier output is padded to one full lane tile for dense stores


# ----------------------------- fused kernel -----------------------------

def _bert_fused_kernel(
    # scalar prefetch
    vl_ref,
    # inputs
    x_ref, emb_g_ref, emb_b_ref,
    wqkv_ref, bqkv_ref, wo_ref, bo_ref,
    w1_ref, b1_ref, w2_ref, b2_ref,
    ln1_g_ref, ln1_b_ref, ln2_g_ref, ln2_b_ref,
    pool_w_ref, pool_b_ref, cls_w_ref, cls_b_ref,
    # outputs
    out_ref,
    # scratch
    h_ref, ctx_ref,
    *, n_layers, n_heads, batch, seq, eps):
  """One encoder layer per grid step; h carried in VMEM scratch."""
  hidden = h_ref.shape[-1]
  d_head = hidden // n_heads
  scale = 1.0 / math.sqrt(d_head)
  l = pl.program_id(0)

  def layernorm(v, g, b):
    mu = jnp.mean(v, axis=-1, keepdims=True)
    var = jnp.mean(jnp.square(v - mu), axis=-1, keepdims=True)
    return (v - mu) * jax.lax.rsqrt(var + eps) * g + b

  def gelu(v):
    # tanh approximation (runs on the EUP).
    # TODO(synk): switch to exact-erf GELU if bit parity with HF BERT matters.
    c = math.sqrt(2.0 / math.pi)
    return 0.5 * v * (1.0 + jnp.tanh(c * (v + 0.044715 * v * v * v)))

  def mm(a, b_mat):
    # bf16 MXU inputs, f32 accumulation.
    return jnp.dot(a.astype(jnp.bfloat16), b_mat.astype(jnp.bfloat16),
                   preferred_element_type=jnp.float32)

  # ---- layer 0: initialize the carried hidden state from the embedding LN.
  @pl.when(l == 0)
  def _():
    h_ref[...] = layernorm(x_ref[...].astype(jnp.float32),
                           emb_g_ref[...], emb_b_ref[...])

  # ---- key-valid attention bias, built in-kernel from SMEM valid_length.
  zero = jnp.float32(0.0)
  neg = jnp.float32(-1e9)
  iota_keys = jax.lax.broadcasted_iota(jnp.int32, (1, 1, seq), 2)
  bias_rows = []
  for b in range(batch):
    bias_rows.append(jnp.where(iota_keys < vl_ref[b], zero, neg))
  attn_bias = jnp.concatenate(bias_rows, axis=0)          # [B, 1, S] f32

  x = h_ref[...]                                          # [B*S, H] f32

  # ---- fused QKV projection: one [B*S,H] @ [H,3H] matmul.
  qkv = mm(x, wqkv_ref[...]) + bqkv_ref[...]              # [B*S, 3H] f32
  q = ((qkv[:, :hidden] * scale)                          # fold 1/sqrt(d) into q
       .reshape(batch, seq, hidden).astype(jnp.bfloat16))
  k = qkv[:, hidden:2 * hidden].reshape(batch, seq, hidden).astype(jnp.bfloat16)
  v = qkv[:, 2 * hidden:].reshape(batch, seq, hidden).astype(jnp.bfloat16)

  # ---- multi-head attention, batched over B ([B,S,S] scores per head).
  for hh in range(n_heads):
    lo = hh * d_head
    qh = q[:, :, lo:lo + d_head]
    kh = k[:, :, lo:lo + d_head]
    vh = v[:, :, lo:lo + d_head]
    s = jnp.einsum('bqd,bkd->bqk', qh, kh,
                   preferred_element_type=jnp.float32)    # [B, S, S]
    s = s + attn_bias
    m = jnp.max(s, axis=-1, keepdims=True)
    p = jnp.exp(s - m)
    p = p * pl.reciprocal(jnp.sum(p, axis=-1, keepdims=True), approx=True)
    ctx = jnp.einsum('bqk,bkd->bqd', p.astype(jnp.bfloat16), vh,
                     preferred_element_type=jnp.float32)  # [B, S, d]
    ctx_ref[:, :, lo:lo + d_head] = ctx                   # lane-offset write

  # ---- single full-depth output projection: [B*S,H] @ [H,H].
  attn = mm(ctx_ref[...].reshape(batch * seq, hidden), wo_ref[...]) + bo_ref[...]
  h1 = layernorm(attn + x, ln1_g_ref[...], ln1_b_ref[...])

  # ---- FFN.
  ffn = gelu(mm(h1, w1_ref[...]) + b1_ref[...])
  ffn = mm(ffn, w2_ref[...]) + b2_ref[...]
  h2 = layernorm(ffn + h1, ln2_g_ref[...], ln2_b_ref[...])
  h_ref[...] = h2

  # ---- last layer: fused pooler (tanh on CLS) + classifier, vectorized over B.
  # nn.Dropout(0.1) is the identity in eval/inference mode.
  # TODO(synk): training-mode dropout would use pltpu.prng_seed/prng_random_bits.
  @pl.when(l == n_layers - 1)
  def _():
    cls_tok = h2.reshape(batch, seq, hidden)[:, 0, :]     # [B, H]
    pooled = jnp.tanh(mm(cls_tok, pool_w_ref[...]) + pool_b_ref[...])
    logits = mm(pooled, cls_w_ref[...]) + cls_b_ref[...]  # [B, LANE]
    out_ref[...] = logits.astype(out_ref.dtype)


def _layer_spec(tail_shape):
  """Per-layer (stacked) weight: block index = layer id, leading dim squeezed."""
  nz = len(tail_shape)
  return pl.BlockSpec((pl.Squeezed(),) + tuple(tail_shape),
                      lambda l, vl, _nz=nz: (l,) + (0,) * _nz)


def _const_spec(shape):
  nz = len(shape)
  return pl.BlockSpec(tuple(shape), lambda l, vl, _nz=nz: (0,) * _nz)


# ----------------------------- parameters -----------------------------

def init_params(key, *, vocab=50, type_vocab=2, max_pos=16, hidden=32,
                n_heads=4, inter=64, n_layers=2, num_classes=4):
  def norm(k, shape):
    return jax.random.normal(k, shape, jnp.float32) * 0.02

  keys = iter(jax.random.split(key, 64))
  p = {"hidden": hidden, "n_heads": n_heads, "num_classes": num_classes}
  p["word_emb"] = norm(next(keys), (vocab, hidden))
  p["pos_emb"] = norm(next(keys), (max_pos, hidden))
  p["type_emb"] = norm(next(keys), (type_vocab, hidden))
  p["emb_ln_g"] = jnp.ones((hidden,), jnp.float32)
  p["emb_ln_b"] = jnp.zeros((hidden,), jnp.float32)

  layers = []
  for _ in range(n_layers):
    l = {}
    for name, shape in [("wq", (hidden, hidden)), ("wk", (hidden, hidden)),
                        ("wv", (hidden, hidden)), ("wo", (hidden, hidden)),
                        ("w1", (hidden, inter)), ("w2", (inter, hidden))]:
      l[name] = norm(next(keys), shape)
    for name, n in [("bq", hidden), ("bk", hidden), ("bv", hidden),
                    ("bo", hidden), ("b1", inter), ("b2", hidden)]:
      l[name] = jnp.zeros((n,), jnp.float32)
    l["ln1_g"] = jnp.ones((hidden,), jnp.float32)
    l["ln1_b"] = jnp.zeros((hidden,), jnp.float32)
    l["ln2_g"] = jnp.ones((hidden,), jnp.float32)
    l["ln2_b"] = jnp.zeros((hidden,), jnp.float32)
    layers.append(l)
  p["layers"] = layers

  p["pool_w"] = norm(next(keys), (hidden, hidden))
  p["pool_b"] = jnp.zeros((hidden,), jnp.float32)
  p["cls_w"] = norm(next(keys), (hidden, num_classes))
  p["cls_b"] = jnp.zeros((num_classes,), jnp.float32)
  return p


# ----------------------------- forward (glue) -----------------------------

def bert_classifier_forward(params, token_ids, valid_length, segment_ids):
  B, S = token_ids.shape
  H = params["hidden"]
  n_heads = params["n_heads"]
  n_layers = len(params["layers"])
  n_cls = params["num_classes"]
  inter = params["layers"][0]["w1"].shape[1]

  # Embedding gathers stay in plain JAX (glue); everything else is in-kernel.
  x = (params["word_emb"][token_ids]
       + params["pos_emb"][jnp.arange(S)][None, :, :]
       + params["type_emb"][segment_ids.astype(jnp.int32)])
  x = x.reshape(B * S, H).astype(jnp.float32)

  # Pack / stack per-layer weights; fuse QKV; bf16 for all big matmul weights.
  def stack(name):
    return jnp.stack([l[name] for l in params["layers"]])

  wqkv = jnp.concatenate([stack("wq"), stack("wk"), stack("wv")],
                         axis=-1).astype(jnp.bfloat16)       # [L, H, 3H]
  bqkv = jnp.concatenate([stack("bq"), stack("bk"), stack("bv")],
                         axis=-1)[:, None, :]                # [L, 1, 3H]
  wo = stack("wo").astype(jnp.bfloat16)                      # [L, H, H]
  bo = stack("bo")[:, None, :]
  w1 = stack("w1").astype(jnp.bfloat16)                      # [L, H, I]
  b1 = stack("b1")[:, None, :]
  w2 = stack("w2").astype(jnp.bfloat16)                      # [L, I, H]
  b2 = stack("b2")[:, None, :]
  ln1_g = stack("ln1_g")[:, None, :]
  ln1_b = stack("ln1_b")[:, None, :]
  ln2_g = stack("ln2_g")[:, None, :]
  ln2_b = stack("ln2_b")[:, None, :]
  emb_g = params["emb_ln_g"][None, :]
  emb_b = params["emb_ln_b"][None, :]
  pool_w = params["pool_w"].astype(jnp.bfloat16)
  pool_b = params["pool_b"][None, :]
  # Pad classifier to a full 128-lane output tile (slice after the call).
  cls_w = jnp.zeros((H, LANE), jnp.float32).at[:, :n_cls].set(
      params["cls_w"]).astype(jnp.bfloat16)
  cls_b = jnp.zeros((1, LANE), jnp.float32).at[0, :n_cls].set(params["cls_b"])

  in_specs = [
      _const_spec((B * S, H)),              # x (embeddings)
      _const_spec((1, H)),                  # emb_ln gamma
      _const_spec((1, H)),                  # emb_ln beta
      _layer_spec((H, 3 * H)),              # wqkv
      _layer_spec((1, 3 * H)),              # bqkv
      _layer_spec((H, H)),                  # wo
      _layer_spec((1, H)),                  # bo
      _layer_spec((H, inter)),              # w1
      _layer_spec((1, inter)),              # b1
      _layer_spec((inter, H)),              # w2
      _layer_spec((1, H)),                  # b2
      _layer_spec((1, H)),                  # ln1_g
      _layer_spec((1, H)),                  # ln1_b
      _layer_spec((1, H)),                  # ln2_g
      _layer_spec((1, H)),                  # ln2_b
      _const_spec((H, H)),                  # pool_w
      _const_spec((1, H)),                  # pool_b
      _const_spec((H, LANE)),               # cls_w (padded)
      _const_spec((1, LANE)),               # cls_b (padded)
  ]

  grid_spec = pltpu.PrefetchScalarGridSpec(
      num_scalar_prefetch=1,                # valid_length -> SMEM
      grid=(n_layers,),
      in_specs=in_specs,
      out_specs=_const_spec((B, LANE)),
      scratch_shapes=[
          pltpu.VMEM((B * S, H), jnp.float32),   # carried hidden state
          pltpu.VMEM((B, S, H), jnp.float32),    # per-head context assembly
      ])

  kernel = functools.partial(_bert_fused_kernel, n_layers=n_layers,
                             n_heads=n_heads, batch=B, seq=S, eps=1e-12)

  logits_padded = pl.pallas_call(
      kernel,
      out_shape=jax.ShapeDtypeStruct((B, LANE), jnp.float32),
      grid_spec=grid_spec,
      compiler_params=pltpu.CompilerParams(
          dimension_semantics=("arbitrary",),      # layer axis carries h
          vmem_limit_bytes=32 * 1024 * 1024),
  )(valid_length.astype(jnp.int32), x, emb_g, emb_b,
    wqkv, bqkv, wo, bo, w1, b1, w2, b2,
    ln1_g, ln1_b, ln2_g, ln2_b,
    pool_w, pool_b, cls_w, cls_b)

  return logits_padded[:, :n_cls]


# ----------------------------- Driver -----------------------------

if __name__ == "__main__":
  B, S = 2, 8
  VOCAB, TYPE_VOCAB, HIDDEN, N_HEADS, INTER, N_LAYERS, NUM_CLASSES = (
      50, 2, 32, 4, 64, 2, 4)

  key = jax.random.PRNGKey(0)
  k_param, k_tok, k_seg = jax.random.split(key, 3)

  params = init_params(k_param, vocab=VOCAB, type_vocab=TYPE_VOCAB, max_pos=S,
                       hidden=HIDDEN, n_heads=N_HEADS, inter=INTER,
                       n_layers=N_LAYERS, num_classes=NUM_CLASSES)

  token_ids = jax.random.randint(k_tok, (B, S), 0, VOCAB, dtype=jnp.int32)
  valid_length = jnp.array([5, 8], dtype=jnp.int32)
  segment_ids = jax.random.randint(k_seg, (B, S), 0, TYPE_VOCAB, dtype=jnp.int32)

  logits = bert_classifier_forward(params, token_ids, valid_length, segment_ids)
  logits = jax.block_until_ready(logits)
  assert logits.shape == (B, NUM_CLASSES) and logits.dtype == jnp.float32
  print("KERNEL_OK")
</pallas_src>

<mosaic_0001>
module attributes {stable_mosaic.version = 11 : i64} {
  func.func @_bert_fused_kernel(%arg0: i32, %arg1: memref<2xi32, #tpu.memory_space<smem>>, %arg2: memref<16x32xf32, #tpu.memory_space<vmem>>, %arg3: memref<1x32xf32, #tpu.memory_space<vmem>>, %arg4: memref<1x32xf32, #tpu.memory_space<vmem>>, %arg5: memref<1x32x96xbf16, #tpu.memory_space<vmem>>, %arg6: memref<1x1x96xf32, #tpu.memory_space<vmem>>, %arg7: memref<1x32x32xbf16, #tpu.memory_space<vmem>>, %arg8: memref<1x1x32xf32, #tpu.memory_space<vmem>>, %arg9: memref<1x32x64xbf16, #tpu.memory_space<vmem>>, %arg10: memref<1x1x64xf32, #tpu.memory_space<vmem>>, %arg11: memref<1x64x32xbf16, #tpu.memory_space<vmem>>, %arg12: memref<1x1x32xf32, #tpu.memory_space<vmem>>, %arg13: memref<1x1x32xf32, #tpu.memory_space<vmem>>, %arg14: memref<1x1x32xf32, #tpu.memory_space<vmem>>, %arg15: memref<1x1x32xf32, #tpu.memory_space<vmem>>, %arg16: memref<1x1x32xf32, #tpu.memory_space<vmem>>, %arg17: memref<32x32xbf16, #tpu.memory_space<vmem>>, %arg18: memref<1x32xf32, #tpu.memory_space<vmem>>, %arg19: memref<32x128xbf16, #tpu.memory_space<vmem>>, %arg20: memref<1x128xf32, #tpu.memory_space<vmem>>, %arg21: memref<2x128xf32, #tpu.memory_space<vmem>>, %arg22: memref<16x32xf32, #tpu.memory_space<vmem>>, %arg23: memref<2x8x32xf32, #tpu.memory_space<vmem>>) attributes {dimension_semantics = [#tpu.dimension_semantics<arbitrary>], iteration_bounds = array<i64: 2>, scalar_prefetch = 1 : i64, scratch_operands = 2 : i64, tpu.core_type = #tpu.core_type<tc>, window_params = [{pipeline_mode = #tpu.pipeline_mode<synchronous>, transform_indices = @transform_0, window_bounds = array<i64: 16, 32>}, {pipeline_mode = #tpu.pipeline_mode<synchronous>, transform_indices = @transform_1, window_bounds = array<i64: 1, 32>}, {pipeline_mode = #tpu.pipeline_mode<synchronous>, transform_indices = @transform_2, window_bounds = array<i64: 1, 32>}, {transform_indices = @transform_3, window_bounds = array<i64: 1, 32, 96>}, {transform_indices = @transform_4, window_bounds = array<i64: 1, 1, 96>}, {transform_indices = @transform_5, window_bounds = array<i64: 1, 32, 32>}, {transform_indices = @transform_6, window_bounds = array<i64: 1, 1, 32>}, {transform_indices = @transform_7, window_bounds = array<i64: 1, 32, 64>}, {transform_indices = @transform_8, window_bounds = array<i64: 1, 1, 64>}, {transform_indices = @transform_9, window_bounds = array<i64: 1, 64, 32>}, {transform_indices = @transform_10, window_bounds = array<i64: 1, 1, 32>}, {transform_indices = @transform_11, window_bounds = array<i64: 1, 1, 32>}, {transform_indices = @transform_12, window_bounds = array<i64: 1, 1, 32>}, {transform_indices = @transform_13, window_bounds = array<i64: 1, 1, 32>}, {transform_indices = @transform_14, window_bounds = array<i64: 1, 1, 32>}, {pipeline_mode = #tpu.pipeline_mode<synchronous>, transform_indices = @transform_15, window_bounds = array<i64: 32, 32>}, {pipeline_mode = #tpu.pipeline_mode<synchronous>, transform_indices = @transform_16, window_bounds = array<i64: 1, 32>}, {pipeline_mode = #tpu.pipeline_mode<synchronous>, transform_indices = @transform_17, window_bounds = array<i64: 32, 128>}, {pipeline_mode = #tpu.pipeline_mode<synchronous>, transform_indices = @transform_18, window_bounds = array<i64: 1, 128>}, {pipeline_mode = #tpu.pipeline_mode<synchronous>, transform_indices = @transform_19, window_bounds = array<i64: 2, 128>}]} {
    %c0_i32 = arith.constant 0 : i32
    %0 = arith.cmpi eq, %arg0, %c0_i32 : i32
    %1 = arith.extui %0 : i1 to i32
    %c0_i32_0 = arith.constant 0 : i32
    %2 = arith.cmpi ne, %1, %c0_i32_0 : i32
    scf.if %2 {
      %c0_92 = arith.constant 0 : index
      %c0_93 = arith.constant 0 : index
      %210 = vector.load %arg2[%c0_92, %c0_93] : memref<16x32xf32, #tpu.memory_space<vmem>>, vector<16x32xf32>
      %c0_94 = arith.constant 0 : index
      %c0_95 = arith.constant 0 : index
      %211 = vector.load %arg3[%c0_94, %c0_95] : memref<1x32xf32, #tpu.memory_space<vmem>>, vector<1x32xf32>
      %c0_96 = arith.constant 0 : index
      %c0_97 = arith.constant 0 : index
      %212 = vector.load %arg4[%c0_96, %c0_97] : memref<1x32xf32, #tpu.memory_space<vmem>>, vector<1x32xf32>
      %cst_98 = arith.constant dense<0.000000e+00> : vector<16xf32>
      %213 = vector.multi_reduction <add>, %210, %cst_98 [1] : vector<16x32xf32> to vector<16xf32>
      %214 = vector.shape_cast %213 : vector<16xf32> to vector<16x1xf32>
      %cst_99 = arith.constant 3.200000e+01 : f32
      %215 = vector.broadcast %cst_99 : f32 to vector<16x1xf32>
      %216 = arith.divf %214, %215 : vector<16x1xf32>
      %217 = vector.broadcast %216 : vector<16x1xf32> to vector<16x32xf32>
      %218 = arith.subf %210, %217 : vector<16x32xf32>
      %219 = arith.mulf %218, %218 : vector<16x32xf32>
      %cst_100 = arith.constant dense<0.000000e+00> : vector<16xf32>
      %220 = vector.multi_reduction <add>, %219, %cst_100 [1] : vector<16x32xf32> to vector<16xf32>
      %221 = vector.shape_cast %220 : vector<16xf32> to vector<16x1xf32>
      %cst_101 = arith.constant 3.200000e+01 : f32
      %222 = vector.broadcast %cst_101 : f32 to vector<16x1xf32>
      %223 = arith.divf %221, %222 : vector<16x1xf32>
      %224 = vector.broadcast %216 : vector<16x1xf32> to vector<16x32xf32>
      %225 = arith.subf %210, %224 : vector<16x32xf32>
      %cst_102 = arith.constant 9.99999996E-13 : f32
      %226 = vector.broadcast %cst_102 : f32 to vector<16x1xf32>
      %227 = arith.addf %223, %226 : vector<16x1xf32>
      %228 = math.rsqrt %227 : vector<16x1xf32>
      %229 = vector.broadcast %228 : vector<16x1xf32> to vector<16x32xf32>
      %230 = arith.mulf %225, %229 : vector<16x32xf32>
      %231 = vector.broadcast %211 : vector<1x32xf32> to vector<16x32xf32>
      %232 = arith.mulf %230, %231 : vector<16x32xf32>
      %233 = vector.broadcast %212 : vector<1x32xf32> to vector<16x32xf32>
      %234 = arith.addf %232, %233 : vector<16x32xf32>
      %c0_103 = arith.constant 0 : index
      %c0_104 = arith.constant 0 : index
      %235 = vector.load %arg22[%c0_103, %c0_104] : memref<16x32xf32, #tpu.memory_space<vmem>>, vector<16x32xf32>
      tpu.vector_store %arg22[%c0_103, %c0_104], %234 {strides = array<i32>} : memref<16x32xf32, #tpu.memory_space<vmem>>, vector<16x32xf32>,
    } else {
    }
    %3 = tpu.iota {dimensions = array<i32: 2>} : vector<1x1x8xi32>
    %c0 = arith.constant 0 : index
    %4 = memref.load %arg1[%c0] : memref<2xi32, #tpu.memory_space<smem>>
    %5 = vector.broadcast %4 : i32 to vector<1x1x8xi32>
    %6 = arith.cmpi slt, %3, %5 : vector<1x1x8xi32>
    %cst = arith.constant 0.000000e+00 : f32
    %cst_1 = arith.constant -1.000000e+09 : f32
    %7 = vector.broadcast %cst : f32 to vector<1x1x8xf32>
    %8 = vector.broadcast %cst_1 : f32 to vector<1x1x8xf32>
    %9 = arith.select %6, %7, %8 : vector<1x1x8xi1>, vector<1x1x8xf32>
    %c1 = arith.constant 1 : index
    %10 = memref.load %arg1[%c1] : memref<2xi32, #tpu.memory_space<smem>>
    %11 = vector.broadcast %10 : i32 to vector<1x1x8xi32>
    %12 = arith.cmpi slt, %3, %11 : vector<1x1x8xi32>
    %cst_2 = arith.constant 0.000000e+00 : f32
    %cst_3 = arith.constant -1.000000e+09 : f32
    %13 = vector.broadcast %cst_2 : f32 to vector<1x1x8xf32>
    %14 = vector.broadcast %cst_3 : f32 to vector<1x1x8xf32>
    %15 = arith.select %12, %13, %14 : vector<1x1x8xi1>, vector<1x1x8xf32>
    %16 = tpu.concatenate %9, %15 in 0 : vector<1x1x8xf32>, vector<1x1x8xf32> -> vector<2x1x8xf32>
    %c0_4 = arith.constant 0 : index
    %c0_5 = arith.constant 0 : index
    %17 = vector.load %arg22[%c0_4, %c0_5] : memref<16x32xf32, #tpu.memory_space<vmem>>, vector<16x32xf32>
    %c0_6 = arith.constant 0 : index
    %c0_7 = arith.constant 0 : index
    %c0_8 = arith.constant 0 : index
    %18 = vector.load %arg5[%c0_6, %c0_7, %c0_8] : memref<1x32x96xbf16, #tpu.memory_space<vmem>>, vector<1x32x96xbf16>
    %19 = vector.shape_cast %18 : vector<1x32x96xbf16> to vector<32x96xbf16>
    %20 = arith.truncf %17 : vector<16x32xf32> to vector<16x32xbf16>
    %cst_9 = arith.constant dense<0.000000e+00> : vector<16x96xf32>
    %21 = tpu.matmul %20, %19, %cst_9 {dimension_numbers = #tpu.dot_dimension_numbers<[1], [0], [0], [1], [0, 0, 1, 1], [], []>} : vector<16x32xbf16>, vector<32x96xbf16>, vector<16x96xf32> -> vector<16x96xf32>
    %c0_10 = arith.constant 0 : index
    %c0_11 = arith.constant 0 : index
    %c0_12 = arith.constant 0 : index
    %22 = vector.load %arg6[%c0_10, %c0_11, %c0_12] : memref<1x1x96xf32, #tpu.memory_space<vmem>>, vector<1x1x96xf32>
    %23 = vector.shape_cast %22 : vector<1x1x96xf32> to vector<1x96xf32>
    %24 = vector.broadcast %23 : vector<1x96xf32> to vector<16x96xf32>
    %25 = arith.addf %21, %24 : vector<16x96xf32>
    %26 = vector.extract_strided_slice %25 {offsets = [0, 0], sizes = [16, 32], strides = [1, 1]} : vector<16x96xf32> to vector<16x32xf32>
    %cst_13 = arith.constant 0.353553385 : f32
    %27 = vector.broadcast %cst_13 : f32 to vector<16x32xf32>
    %28 = arith.mulf %26, %27 : vector<16x32xf32>
    %29 = vector.shape_cast %28 : vector<16x32xf32> to vector<2x8x32xf32>
    %30 = arith.truncf %29 : vector<2x8x32xf32> to vector<2x8x32xbf16>
    %31 = vector.extract_strided_slice %25 {offsets = [0, 32], sizes = [16, 32], strides = [1, 1]} : vector<16x96xf32> to vector<16x32xf32>
    %32 = vector.shape_cast %31 : vector<16x32xf32> to vector<2x8x32xf32>
    %33 = arith.truncf %32 : vector<2x8x32xf32> to vector<2x8x32xbf16>
    %34 = vector.extract_strided_slice %25 {offsets = [0, 64], sizes = [16, 32], strides = [1, 1]} : vector<16x96xf32> to vector<16x32xf32>
    %35 = vector.shape_cast %34 : vector<16x32xf32> to vector<2x8x32xf32>
    %36 = arith.truncf %35 : vector<2x8x32xf32> to vector<2x8x32xbf16>
    %37 = vector.extract_strided_slice %30 {offsets = [0, 0, 0], sizes = [2, 8, 8], strides = [1, 1, 1]} : vector<2x8x32xbf16> to vector<2x8x8xbf16>
    %38 = vector.extract_strided_slice %33 {offsets = [0, 0, 0], sizes = [2, 8, 8], strides = [1, 1, 1]} : vector<2x8x32xbf16> to vector<2x8x8xbf16>
    %39 = vector.extract_strided_slice %36 {offsets = [0, 0, 0], sizes = [2, 8, 8], strides = [1, 1, 1]} : vector<2x8x32xbf16> to vector<2x8x8xbf16>
    "tpu.trace_start"() <{level = 10 : i32, message = "bqd,bkd->bqk"}> : () -> ()
    %cst_14 = arith.constant dense<0.000000e+00> : vector<2x8x8xf32>
    %40 = tpu.matmul %37, %38, %cst_14 {dimension_numbers = #tpu.dot_dimension_numbers<[2], [2], [1], [1], [0, 0, 0, 1, 1, 1], [0], [0]>} : vector<2x8x8xbf16>, vector<2x8x8xbf16>, vector<2x8x8xf32> -> vector<2x8x8xf32>
    "tpu.trace_stop"() : () -> ()
    %41 = vector.broadcast %16 : vector<2x1x8xf32> to vector<2x8x8xf32>
    %42 = arith.addf %40, %41 : vector<2x8x8xf32>
    %cst_15 = arith.constant dense<0xFF800000> : vector<2x8xf32>
    %43 = vector.multi_reduction <maximumf>, %42, %cst_15 [2] : vector<2x8x8xf32> to vector<2x8xf32>
    %44 = vector.shape_cast %43 : vector<2x8xf32> to vector<2x8x1xf32>
    %45 = vector.broadcast %44 : vector<2x8x1xf32> to vector<2x8x8xf32>
    %46 = arith.subf %42, %45 : vector<2x8x8xf32>
    %47 = math.exp %46 : vector<2x8x8xf32>
    %cst_16 = arith.constant dense<0.000000e+00> : vector<2x8xf32>
    %48 = vector.multi_reduction <add>, %47, %cst_16 [2] : vector<2x8x8xf32> to vector<2x8xf32>
    %49 = vector.shape_cast %48 : vector<2x8xf32> to vector<2x8x1xf32>
    %50 = tpu.reciprocal %49 {approx = true} : vector<2x8x1xf32> -> vector<2x8x1xf32>
    %51 = vector.broadcast %50 : vector<2x8x1xf32> to vector<2x8x8xf32>
    %52 = arith.mulf %47, %51 : vector<2x8x8xf32>
    %53 = arith.truncf %52 : vector<2x8x8xf32> to vector<2x8x8xbf16>
    "tpu.trace_start"() <{level = 10 : i32, message = "bqk,bkd->bqd"}> : () -> ()
    %cst_17 = arith.constant dense<0.000000e+00> : vector<2x8x8xf32>
    %54 = tpu.matmul %53, %39, %cst_17 {dimension_numbers = #tpu.dot_dimension_numbers<[2], [1], [1], [2], [0, 0, 0, 1, 1, 2], [0], [0]>} : vector<2x8x8xbf16>, vector<2x8x8xbf16>, vector<2x8x8xf32> -> vector<2x8x8xf32>
    "tpu.trace_stop"() : () -> ()
    %c0_18 = arith.constant 0 : index
    %c0_19 = arith.constant 0 : index
    %c0_20 = arith.constant 0 : index
    %55 = vector.load %arg23[%c0_18, %c0_19, %c0_20] : memref<2x8x32xf32, #tpu.memory_space<vmem>>, vector<2x8x8xf32>
    tpu.vector_store %arg23[%c0_18, %c0_19, %c0_20], %54 {strides = array<i32>} : memref<2x8x32xf32, #tpu.memory_space<vmem>>, vector<2x8x8xf32>,
    %56 = vector.extract_strided_slice %30 {offsets = [0, 0, 8], sizes = [2, 8, 8], strides = [1, 1, 1]} : vector<2x8x32xbf16> to vector<2x8x8xbf16>
    %57 = vector.extract_strided_slice %33 {offsets = [0, 0, 8], sizes = [2, 8, 8], strides = [1, 1, 1]} : vector<2x8x32xbf16> to vector<2x8x8xbf16>
    %58 = vector.extract_strided_slice %36 {offsets = [0, 0, 8], sizes = [2, 8, 8], strides = [1, 1, 1]} : vector<2x8x32xbf16> to vector<2x8x8xbf16>
    "tpu.trace_start"() <{level = 10 : i32, message = "bqd,bkd->bqk"}> : () -> ()
    %cst_21 = arith.constant dense<0.000000e+00> : vector<2x8x8xf32>
    %59 = tpu.matmul %56, %57, %cst_21 {dimension_numbers = #tpu.dot_dimension_numbers<[2], [2], [1], [1], [0, 0, 0, 1, 1, 1], [0], [0]>} : vector<2x8x8xbf16>, vector<2x8x8xbf16>, vector<2x8x8xf32> -> vector<2x8x8xf32>
    "tpu.trace_stop"() : () -> ()
    %60 = vector.broadcast %16 : vector<2x1x8xf32> to vector<2x8x8xf32>
    %61 = arith.addf %59, %60 : vector<2x8x8xf32>
    %cst_22 = arith.constant dense<0xFF800000> : vector<2x8xf32>
    %62 = vector.multi_reduction <maximumf>, %61, %cst_22 [2] : vector<2x8x8xf32> to vector<2x8xf32>
    %63 = vector.shape_cast %62 : vector<2x8xf32> to vector<2x8x1xf32>
    %64 = vector.broadcast %63 : vector<2x8x1xf32> to vector<2x8x8xf32>
    %65 = arith.subf %61, %64 : vector<2x8x8xf32>
    %66 = math.exp %65 : vector<2x8x8xf32>
    %cst_23 = arith.constant dense<0.000000e+00> : vector<2x8xf32>
    %67 = vector.multi_reduction <add>, %66, %cst_23 [2] : vector<2x8x8xf32> to vector<2x8xf32>
    %68 = vector.shape_cast %67 : vector<2x8xf32> to vector<2x8x1xf32>
    %69 = tpu.reciprocal %68 {approx = true} : vector<2x8x1xf32> -> vector<2x8x1xf32>
    %70 = vector.broadcast %69 : vector<2x8x1xf32> to vector<2x8x8xf32>
    %71 = arith.mulf %66, %70 : vector<2x8x8xf32>
    %72 = arith.truncf %71 : vector<2x8x8xf32> to vector<2x8x8xbf16>
    "tpu.trace_start"() <{level = 10 : i32, message = "bqk,bkd->bqd"}> : () -> ()
    %cst_24 = arith.constant dense<0.000000e+00> : vector<2x8x8xf32>
    %73 = tpu.matmul %72, %58, %cst_24 {dimension_numbers = #tpu.dot_dimension_numbers<[2], [1], [1], [2], [0, 0, 0, 1, 1, 2], [0], [0]>} : vector<2x8x8xbf16>, vector<2x8x8xbf16>, vector<2x8x8xf32> -> vector<2x8x8xf32>
    "tpu.trace_stop"() : () -> ()
    %c0_25 = arith.constant 0 : index
    %c0_26 = arith.constant 0 : index
    %c8 = arith.constant 8 : index
    %74 = vector.load %arg23[%c0_25, %c0_26, %c8] : memref<2x8x32xf32, #tpu.memory_space<vmem>>, vector<2x8x8xf32>
    tpu.vector_store %arg23[%c0_25, %c0_26, %c8], %73 {strides = array<i32>} : memref<2x8x32xf32, #tpu.memory_space<vmem>>, vector<2x8x8xf32>,
    %75 = vector.extract_strided_slice %30 {offsets = [0, 0, 16], sizes = [2, 8, 8], strides = [1, 1, 1]} : vector<2x8x32xbf16> to vector<2x8x8xbf16>
    %76 = vector.extract_strided_slice %33 {offsets = [0, 0, 16], sizes = [2, 8, 8], strides = [1, 1, 1]} : vector<2x8x32xbf16> to vector<2x8x8xbf16>
    %77 = vector.extract_strided_slice %36 {offsets = [0, 0, 16], sizes = [2, 8, 8], strides = [1, 1, 1]} : vector<2x8x32xbf16> to vector<2x8x8xbf16>
    "tpu.trace_start"() <{level = 10 : i32, message = "bqd,bkd->bqk"}> : () -> ()
    %cst_27 = arith.constant dense<0.000000e+00> : vector<2x8x8xf32>
    %78 = tpu.matmul %75, %76, %cst_27 {dimension_numbers = #tpu.dot_dimension_numbers<[2], [2], [1], [1], [0, 0, 0, 1, 1, 1], [0], [0]>} : vector<2x8x8xbf16>, vector<2x8x8xbf16>, vector<2x8x8xf32> -> vector<2x8x8xf32>
    "tpu.trace_stop"() : () -> ()
    %79 = vector.broadcast %16 : vector<2x1x8xf32> to vector<2x8x8xf32>
    %80 = arith.addf %78, %79 : vector<2x8x8xf32>
    %cst_28 = arith.constant dense<0xFF800000> : vector<2x8xf32>
    %81 = vector.multi_reduction <maximumf>, %80, %cst_28 [2] : vector<2x8x8xf32> to vector<2x8xf32>
    %82 = vector.shape_cast %81 : vector<2x8xf32> to vector<2x8x1xf32>
    %83 = vector.broadcast %82 : vector<2x8x1xf32> to vector<2x8x8xf32>
    %84 = arith.subf %80, %83 : vector<2x8x8xf32>
    %85 = math.exp %84 : vector<2x8x8xf32>
    %cst_29 = arith.constant dense<0.000000e+00> : vector<2x8xf32>
    %86 = vector.multi_reduction <add>, %85, %cst_29 [2] : vector<2x8x8xf32> to vector<2x8xf32>
    %87 = vector.shape_cast %86 : vector<2x8xf32> to vector<2x8x1xf32>
    %88 = tpu.reciprocal %87 {approx = true} : vector<2x8x1xf32> -> vector<2x8x1xf32>
    %89 = vector.broadcast %88 : vector<2x8x1xf32> to vector<2x8x8xf32>
    %90 = arith.mulf %85, %89 : vector<2x8x8xf32>
    %91 = arith.truncf %90 : vector<2x8x8xf32> to vector<2x8x8xbf16>
    "tpu.trace_start"() <{level = 10 : i32, message = "bqk,bkd->bqd"}> : () -> ()
    %cst_30 = arith.constant dense<0.000000e+00> : vector<2x8x8xf32>
    %92 = tpu.matmul %91, %77, %cst_30 {dimension_numbers = #tpu.dot_dimension_numbers<[2], [1], [1], [2], [0, 0, 0, 1, 1, 2], [0], [0]>} : vector<2x8x8xbf16>, vector<2x8x8xbf16>, vector<2x8x8xf32> -> vector<2x8x8xf32>
    "tpu.trace_stop"() : () -> ()
    %c0_31 = arith.constant 0 : index
    %c0_32 = arith.constant 0 : index
    %c16 = arith.constant 16 : index
    %93 = vector.load %arg23[%c0_31, %c0_32, %c16] : memref<2x8x32xf32, #tpu.memory_space<vmem>>, vector<2x8x8xf32>
    tpu.vector_store %arg23[%c0_31, %c0_32, %c16], %92 {strides = array<i32>} : memref<2x8x32xf32, #tpu.memory_space<vmem>>, vector<2x8x8xf32>,
    %94 = vector.extract_strided_slice %30 {offsets = [0, 0, 24], sizes = [2, 8, 8], strides = [1, 1, 1]} : vector<2x8x32xbf16> to vector<2x8x8xbf16>
    %95 = vector.extract_strided_slice %33 {offsets = [0, 0, 24], sizes = [2, 8, 8], strides = [1, 1, 1]} : vector<2x8x32xbf16> to vector<2x8x8xbf16>
    %96 = vector.extract_strided_slice %36 {offsets = [0, 0, 24], sizes = [2, 8, 8], strides = [1, 1, 1]} : vector<2x8x32xbf16> to vector<2x8x8xbf16>
    "tpu.trace_start"() <{level = 10 : i32, message = "bqd,bkd->bqk"}> : () -> ()
    %cst_33 = arith.constant dense<0.000000e+00> : vector<2x8x8xf32>
    %97 = tpu.matmul %94, %95, %cst_33 {dimension_numbers = #tpu.dot_dimension_numbers<[2], [2], [1], [1], [0, 0, 0, 1, 1, 1], [0], [0]>} : vector<2x8x8xbf16>, vector<2x8x8xbf16>, vector<2x8x8xf32> -> vector<2x8x8xf32>
    "tpu.trace_stop"() : () -> ()
    %98 = vector.broadcast %16 : vector<2x1x8xf32> to vector<2x8x8xf32>
    %99 = arith.addf %97, %98 : vector<2x8x8xf32>
    %cst_34 = arith.constant dense<0xFF800000> : vector<2x8xf32>
    %100 = vector.multi_reduction <maximumf>, %99, %cst_34 [2] : vector<2x8x8xf32> to vector<2x8xf32>
    %101 = vector.shape_cast %100 : vector<2x8xf32> to vector<2x8x1xf32>
    %102 = vector.broadcast %101 : vector<2x8x1xf32> to vector<2x8x8xf32>
    %103 = arith.subf %99, %102 : vector<2x8x8xf32>
    %104 = math.exp %103 : vector<2x8x8xf32>
    %cst_35 = arith.constant dense<0.000000e+00> : vector<2x8xf32>
    %105 = vector.multi_reduction <add>, %104, %cst_35 [2] : vector<2x8x8xf32> to vector<2x8xf32>
    %106 = vector.shape_cast %105 : vector<2x8xf32> to vector<2x8x1xf32>
    %107 = tpu.reciprocal %106 {approx = true} : vector<2x8x1xf32> -> vector<2x8x1xf32>
    %108 = vector.broadcast %107 : vector<2x8x1xf32> to vector<2x8x8xf32>
    %109 = arith.mulf %104, %108 : vector<2x8x8xf32>
    %110 = arith.truncf %109 : vector<2x8x8xf32> to vector<2x8x8xbf16>
    "tpu.trace_start"() <{level = 10 : i32, message = "bqk,bkd->bqd"}> : () -> ()
    %cst_36 = arith.constant dense<0.000000e+00> : vector<2x8x8xf32>
    %111 = tpu.matmul %110, %96, %cst_36 {dimension_numbers = #tpu.dot_dimension_numbers<[2], [1], [1], [2], [0, 0, 0, 1, 1, 2], [0], [0]>} : vector<2x8x8xbf16>, vector<2x8x8xbf16>, vector<2x8x8xf32> -> vector<2x8x8xf32>
    "tpu.trace_stop"() : () -> ()
    %c0_37 = arith.constant 0 : index
    %c0_38 = arith.constant 0 : index
    %c24 = arith.constant 24 : index
    %112 = vector.load %arg23[%c0_37, %c0_38, %c24] : memref<2x8x32xf32, #tpu.memory_space<vmem>>, vector<2x8x8xf32>
    tpu.vector_store %arg23[%c0_37, %c0_38, %c24], %111 {strides = array<i32>} : memref<2x8x32xf32, #tpu.memory_space<vmem>>, vector<2x8x8xf32>,
    %c0_39 = arith.constant 0 : index
    %c0_40 = arith.constant 0 : index
    %c0_41 = arith.constant 0 : index
    %113 = vector.load %arg23[%c0_39, %c0_40, %c0_41] : memref<2x8x32xf32, #tpu.memory_space<vmem>>, vector<2x8x32xf32>
    %114 = vector.shape_cast %113 : vector<2x8x32xf32> to vector<16x32xf32>
    %c0_42 = arith.constant 0 : index
    %c0_43 = arith.constant 0 : index
    %c0_44 = arith.constant 0 : index
    %115 = vector.load %arg7[%c0_42, %c0_43, %c0_44] : memref<1x32x32xbf16, #tpu.memory_space<vmem>>, vector<1x32x32xbf16>
    %116 = vector.shape_cast %115 : vector<1x32x32xbf16> to vector<32x32xbf16>
    %117 = arith.truncf %114 : vector<16x32xf32> to vector<16x32xbf16>
    %cst_45 = arith.constant dense<0.000000e+00> : vector<16x32xf32>
    %118 = tpu.matmul %117, %116, %cst_45 {dimension_numbers = #tpu.dot_dimension_numbers<[1], [0], [0], [1], [0, 0, 1, 1], [], []>} : vector<16x32xbf16>, vector<32x32xbf16>, vector<16x32xf32> -> vector<16x32xf32>
    %c0_46 = arith.constant 0 : index
    %c0_47 = arith.constant 0 : index
    %c0_48 = arith.constant 0 : index
    %119 = vector.load %arg8[%c0_46, %c0_47, %c0_48] : memref<1x1x32xf32, #tpu.memory_space<vmem>>, vector<1x1x32xf32>
    %120 = vector.shape_cast %119 : vector<1x1x32xf32> to vector<1x32xf32>
    %121 = vector.broadcast %120 : vector<1x32xf32> to vector<16x32xf32>
    %122 = arith.addf %118, %121 : vector<16x32xf32>
    %123 = arith.addf %122, %17 : vector<16x32xf32>
    %c0_49 = arith.constant 0 : index
    %c0_50 = arith.constant 0 : index
    %c0_51 = arith.constant 0 : index
    %124 = vector.load %arg13[%c0_49, %c0_50, %c0_51] : memref<1x1x32xf32, #tpu.memory_space<vmem>>, vector<1x1x32xf32>
    %125 = vector.shape_cast %124 : vector<1x1x32xf32> to vector<1x32xf32>
    %c0_52 = arith.constant 0 : index
    %c0_53 = arith.constant 0 : index
    %c0_54 = arith.constant 0 : index
    %126 = vector.load %arg14[%c0_52, %c0_53, %c0_54] : memref<1x1x32xf32, #tpu.memory_space<vmem>>, vector<1x1x32xf32>
    %127 = vector.shape_cast %126 : vector<1x1x32xf32> to vector<1x32xf32>
    %cst_55 = arith.constant dense<0.000000e+00> : vector<16xf32>
    %128 = vector.multi_reduction <add>, %123, %cst_55 [1] : vector<16x32xf32> to vector<16xf32>
    %129 = vector.shape_cast %128 : vector<16xf32> to vector<16x1xf32>
    %cst_56 = arith.constant 3.200000e+01 : f32
    %130 = vector.broadcast %cst_56 : f32 to vector<16x1xf32>
    %131 = arith.divf %129, %130 : vector<16x1xf32>
    %132 = vector.broadcast %131 : vector<16x1xf32> to vector<16x32xf32>
    %133 = arith.subf %123, %132 : vector<16x32xf32>
    %134 = arith.mulf %133, %133 : vector<16x32xf32>
    %cst_57 = arith.constant dense<0.000000e+00> : vector<16xf32>
    %135 = vector.multi_reduction <add>, %134, %cst_57 [1] : vector<16x32xf32> to vector<16xf32>
    %136 = vector.shape_cast %135 : vector<16xf32> to vector<16x1xf32>
    %cst_58 = arith.constant 3.200000e+01 : f32
    %137 = vector.broadcast %cst_58 : f32 to vector<16x1xf32>
    %138 = arith.divf %136, %137 : vector<16x1xf32>
    %139 = vector.broadcast %131 : vector<16x1xf32> to vector<16x32xf32>
    %140 = arith.subf %123, %139 : vector<16x32xf32>
    %cst_59 = arith.constant 9.99999996E-13 : f32
    %141 = vector.broadcast %cst_59 : f32 to vector<16x1xf32>
    %142 = arith.addf %138, %141 : vector<16x1xf32>
    %143 = math.rsqrt %142 : vector<16x1xf32>
    %144 = vector.broadcast %143 : vector<16x1xf32> to vector<16x32xf32>
    %145 = arith.mulf %140, %144 : vector<16x32xf32>
    %146 = vector.broadcast %125 : vector<1x32xf32> to vector<16x32xf32>
    %147 = arith.mulf %145, %146 : vector<16x32xf32>
    %148 = vector.broadcast %127 : vector<1x32xf32> to vector<16x32xf32>
    %149 = arith.addf %147, %148 : vector<16x32xf32>
    %c0_60 = arith.constant 0 : index
    %c0_61 = arith.constant 0 : index
    %c0_62 = arith.constant 0 : index
    %150 = vector.load %arg9[%c0_60, %c0_61, %c0_62] : memref<1x32x64xbf16, #tpu.memory_space<vmem>>, vector<1x32x64xbf16>
    %151 = vector.shape_cast %150 : vector<1x32x64xbf16> to vector<32x64xbf16>
    %152 = arith.truncf %149 : vector<16x32xf32> to vector<16x32xbf16>
    %cst_63 = arith.constant dense<0.000000e+00> : vector<16x64xf32>
    %153 = tpu.matmul %152, %151, %cst_63 {dimension_numbers = #tpu.dot_dimension_numbers<[1], [0], [0], [1], [0, 0, 1, 1], [], []>} : vector<16x32xbf16>, vector<32x64xbf16>, vector<16x64xf32> -> vector<16x64xf32>
    %c0_64 = arith.constant 0 : index
    %c0_65 = arith.constant 0 : index
    %c0_66 = arith.constant 0 : index
    %154 = vector.load %arg10[%c0_64, %c0_65, %c0_66] : memref<1x1x64xf32, #tpu.memory_space<vmem>>, vector<1x1x64xf32>
    %155 = vector.shape_cast %154 : vector<1x1x64xf32> to vector<1x64xf32>
    %156 = vector.broadcast %155 : vector<1x64xf32> to vector<16x64xf32>
    %157 = arith.addf %153, %156 : vector<16x64xf32>
    %cst_67 = arith.constant 5.000000e-01 : f32
    %158 = vector.broadcast %cst_67 : f32 to vector<16x64xf32>
    %159 = arith.mulf %158, %157 : vector<16x64xf32>
    %cst_68 = arith.constant 4.471500e-02 : f32
    %160 = vector.broadcast %cst_68 : f32 to vector<16x64xf32>
    %161 = arith.mulf %160, %157 : vector<16x64xf32>
    %162 = arith.mulf %161, %157 : vector<16x64xf32>
    %163 = arith.mulf %162, %157 : vector<16x64xf32>
    %164 = arith.addf %157, %163 : vector<16x64xf32>
    %cst_69 = arith.constant 0.797884583 : f32
    %165 = vector.broadcast %cst_69 : f32 to vector<16x64xf32>
    %166 = arith.mulf %165, %164 : vector<16x64xf32>
    %167 = math.tanh %166 : vector<16x64xf32>
    %cst_70 = arith.constant 1.000000e+00 : f32
    %168 = vector.broadcast %cst_70 : f32 to vector<16x64xf32>
    %169 = arith.addf %168, %167 : vector<16x64xf32>
    %170 = arith.mulf %159, %169 : vector<16x64xf32>
    %c0_71 = arith.constant 0 : index
    %c0_72 = arith.constant 0 : index
    %c0_73 = arith.constant 0 : index
    %171 = vector.load %arg11[%c0_71, %c0_72, %c0_73] : memref<1x64x32xbf16, #tpu.memory_space<vmem>>, vector<1x64x32xbf16>
    %172 = vector.shape_cast %171 : vector<1x64x32xbf16> to vector<64x32xbf16>
    %173 = arith.truncf %170 : vector<16x64xf32> to vector<16x64xbf16>
    %cst_74 = arith.constant dense<0.000000e+00> : vector<16x32xf32>
    %174 = tpu.matmul %173, %172, %cst_74 {dimension_numbers = #tpu.dot_dimension_numbers<[1], [0], [0], [1], [0, 0, 1, 1], [], []>} : vector<16x64xbf16>, vector<64x32xbf16>, vector<16x32xf32> -> vector<16x32xf32>
    %c0_75 = arith.constant 0 : index
    %c0_76 = arith.constant 0 : index
    %c0_77 = arith.constant 0 : index
    %175 = vector.load %arg12[%c0_75, %c0_76, %c0_77] : memref<1x1x32xf32, #tpu.memory_space<vmem>>, vector<1x1x32xf32>
    %176 = vector.shape_cast %175 : vector<1x1x32xf32> to vector<1x32xf32>
    %177 = vector.broadcast %176 : vector<1x32xf32> to vector<16x32xf32>
    %178 = arith.addf %174, %177 : vector<16x32xf32>
    %179 = arith.addf %178, %149 : vector<16x32xf32>
    %c0_78 = arith.constant 0 : index
    %c0_79 = arith.constant 0 : index
    %c0_80 = arith.constant 0 : index
    %180 = vector.load %arg15[%c0_78, %c0_79, %c0_80] : memref<1x1x32xf32, #tpu.memory_space<vmem>>, vector<1x1x32xf32>
    %181 = vector.shape_cast %180 : vector<1x1x32xf32> to vector<1x32xf32>
    %c0_81 = arith.constant 0 : index
    %c0_82 = arith.constant 0 : index
    %c0_83 = arith.constant 0 : index
    %182 = vector.load %arg16[%c0_81, %c0_82, %c0_83] : memref<1x1x32xf32, #tpu.memory_space<vmem>>, vector<1x1x32xf32>
    %183 = vector.shape_cast %182 : vector<1x1x32xf32> to vector<1x32xf32>
    %cst_84 = arith.constant dense<0.000000e+00> : vector<16xf32>
    %184 = vector.multi_reduction <add>, %179, %cst_84 [1] : vector<16x32xf32> to vector<16xf32>
    %185 = vector.shape_cast %184 : vector<16xf32> to vector<16x1xf32>
    %cst_85 = arith.constant 3.200000e+01 : f32
    %186 = vector.broadcast %cst_85 : f32 to vector<16x1xf32>
    %187 = arith.divf %185, %186 : vector<16x1xf32>
    %188 = vector.broadcast %187 : vector<16x1xf32> to vector<16x32xf32>
    %189 = arith.subf %179, %188 : vector<16x32xf32>
    %190 = arith.mulf %189, %189 : vector<16x32xf32>
    %cst_86 = arith.constant dense<0.000000e+00> : vector<16xf32>
    %191 = vector.multi_reduction <add>, %190, %cst_86 [1] : vector<16x32xf32> to vector<16xf32>
    %192 = vector.shape_cast %191 : vector<16xf32> to vector<16x1xf32>
    %cst_87 = arith.constant 3.200000e+01 : f32
    %193 = vector.broadcast %cst_87 : f32 to vector<16x1xf32>
    %194 = arith.divf %192, %193 : vector<16x1xf32>
    %195 = vector.broadcast %187 : vector<16x1xf32> to vector<16x32xf32>
    %196 = arith.subf %179, %195 : vector<16x32xf32>
    %cst_88 = arith.constant 9.99999996E-13 : f32
    %197 = vector.broadcast %cst_88 : f32 to vector<16x1xf32>
    %198 = arith.addf %194, %197 : vector<16x1xf32>
    %199 = math.rsqrt %198 : vector<16x1xf32>
    %200 = vector.broadcast %199 : vector<16x1xf32> to vector<16x32xf32>
    %201 = arith.mulf %196, %200 : vector<16x32xf32>
    %202 = vector.broadcast %181 : vector<1x32xf32> to vector<16x32xf32>
    %203 = arith.mulf %201, %202 : vector<16x32xf32>
    %204 = vector.broadcast %183 : vector<1x32xf32> to vector<16x32xf32>
    %205 = arith.addf %203, %204 : vector<16x32xf32>
    %c0_89 = arith.constant 0 : index
    %c0_90 = arith.constant 0 : index
    %206 = vector.load %arg22[%c0_89, %c0_90] : memref<16x32xf32, #tpu.memory_space<vmem>>, vector<16x32xf32>
    tpu.vector_store %arg22[%c0_89, %c0_90], %205 {strides = array<i32>} : memref<16x32xf32, #tpu.memory_space<vmem>>, vector<16x32xf32>,
    %c1_i32 = arith.constant 1 : i32
    %207 = arith.cmpi eq, %arg0, %c1_i32 : i32
    %208 = arith.extui %207 : i1 to i32
    %c0_i32_91 = arith.constant 0 : i32
    %209 = arith.cmpi ne, %208, %c0_i32_91 : i32
    scf.if %209 {
      %210 = vector.shape_cast %205 : vector<16x32xf32> to vector<2x8x32xf32>
      %211 = vector.extract_strided_slice %210 {offsets = [0, 0, 0], sizes = [2, 1, 32], strides = [1, 1, 1]} : vector<2x8x32xf32> to vector<2x1x32xf32>
      %212 = vector.shape_cast %211 : vector<2x1x32xf32> to vector<2x32xf32>
      %c0_92 = arith.constant 0 : index
      %c0_93 = arith.constant 0 : index
      %213 = vector.load %arg17[%c0_92, %c0_93] : memref<32x32xbf16, #tpu.memory_space<vmem>>, vector<32x32xbf16>
      %214 = arith.truncf %212 : vector<2x32xf32> to vector<2x32xbf16>
      %cst_94 = arith.constant dense<0.000000e+00> : vector<2x32xf32>
      %215 = tpu.matmul %214, %213, %cst_94 {dimension_numbers = #tpu.dot_dimension_numbers<[1], [0], [0], [1], [0, 0, 1, 1], [], []>} : vector<2x32xbf16>, vector<32x32xbf16>, vector<2x32xf32> -> vector<2x32xf32>
      %c0_95 = arith.constant 0 : index
      %c0_96 = arith.constant 0 : index
      %216 = vector.load %arg18[%c0_95, %c0_96] : memref<1x32xf32, #tpu.memory_space<vmem>>, vector<1x32xf32>
      %217 = vector.broadcast %216 : vector<1x32xf32> to vector<2x32xf32>
      %218 = arith.addf %215, %217 : vector<2x32xf32>
      %219 = math.tanh %218 : vector<2x32xf32>
      %c0_97 = arith.constant 0 : index
      %c0_98 = arith.constant 0 : index
      %220 = vector.load %arg19[%c0_97, %c0_98] : memref<32x128xbf16, #tpu.memory_space<vmem>>, vector<32x128xbf16>
      %221 = arith.truncf %219 : vector<2x32xf32> to vector<2x32xbf16>
      %cst_99 = arith.constant dense<0.000000e+00> : vector<2x128xf32>
      %222 = tpu.matmul %221, %220, %cst_99 {dimension_numbers = #tpu.dot_dimension_numbers<[1], [0], [0], [1], [0, 0, 1, 1], [], []>} : vector<2x32xbf16>, vector<32x128xbf16>, vector<2x128xf32> -> vector<2x128xf32>
      %c0_100 = arith.constant 0 : index
      %c0_101 = arith.constant 0 : index
      %223 = vector.load %arg20[%c0_100, %c0_101] : memref<1x128xf32, #tpu.memory_space<vmem>>, vector<1x128xf32>
      %224 = vector.broadcast %223 : vector<1x128xf32> to vector<2x128xf32>
      %225 = arith.addf %222, %224 : vector<2x128xf32>
      %c0_102 = arith.constant 0 : index
      %c0_103 = arith.constant 0 : index
      %226 = vector.load %arg21[%c0_102, %c0_103] : memref<2x128xf32, #tpu.memory_space<vmem>>, vector<2x128xf32>
      tpu.vector_store %arg21[%c0_102, %c0_103], %225 {strides = array<i32>} : memref<2x128xf32, #tpu.memory_space<vmem>>, vector<2x128xf32>,
    } else {
    }
    return
  }
  func.func @transform_0(%arg0: i32, %arg1: memref<2xi32, #tpu.memory_space<smem>>) -> (i32, i32) {
    %c0_i32 = arith.constant 0 : i32
    %c0_i32_0 = arith.constant 0 : i32
    %c0_i32_1 = arith.constant 0 : i32
    return %c0_i32, %c0_i32_0 : i32, i32
  }
  func.func @transform_1(%arg0: i32, %arg1: memref<2xi32, #tpu.memory_space<smem>>) -> (i32, i32) {
    %c0_i32 = arith.constant 0 : i32
    %c0_i32_0 = arith.constant 0 : i32
    %c0_i32_1 = arith.constant 0 : i32
    return %c0_i32, %c0_i32_0 : i32, i32
  }
  func.func @transform_2(%arg0: i32, %arg1: memref<2xi32, #tpu.memory_space<smem>>) -> (i32, i32) {
    %c0_i32 = arith.constant 0 : i32
    %c0_i32_0 = arith.constant 0 : i32
    %c0_i32_1 = arith.constant 0 : i32
    return %c0_i32, %c0_i32_0 : i32, i32
  }
  func.func @transform_3(%arg0: i32, %arg1: memref<2xi32, #tpu.memory_space<smem>>) -> (i32, i32, i32) {
    %c0_i32 = arith.constant 0 : i32
    %c0_i32_0 = arith.constant 0 : i32
    %c0_i32_1 = arith.constant 0 : i32
    return %arg0, %c0_i32, %c0_i32_0 : i32, i32, i32
  }
  func.func @transform_4(%arg0: i32, %arg1: memref<2xi32, #tpu.memory_space<smem>>) -> (i32, i32, i32) {
    %c0_i32 = arith.constant 0 : i32
    %c0_i32_0 = arith.constant 0 : i32
    %c0_i32_1 = arith.constant 0 : i32
    return %arg0, %c0_i32, %c0_i32_0 : i32, i32, i32
  }
  func.func @transform_5(%arg0: i32, %arg1: memref<2xi32, #tpu.memory_space<smem>>) -> (i32, i32, i32) {
    %c0_i32 = arith.constant 0 : i32
    %c0_i32_0 = arith.constant 0 : i32
    %c0_i32_1 = arith.constant 0 : i32
    return %arg0, %c0_i32, %c0_i32_0 : i32, i32, i32
  }
  func.func @transform_6(%arg0: i32, %arg1: memref<2xi32, #tpu.memory_space<smem>>) -> (i32, i32, i32) {
    %c0_i32 = arith.constant 0 : i32
    %c0_i32_0 = arith.constant 0 : i32
    %c0_i32_1 = arith.constant 0 : i32
    return %arg0, %c0_i32, %c0_i32_0 : i32, i32, i32
  }
  func.func @transform_7(%arg0: i32, %arg1: memref<2xi32, #tpu.memory_space<smem>>) -> (i32, i32, i32) {
    %c0_i32 = arith.constant 0 : i32
    %c0_i32_0 = arith.constant 0 : i32
    %c0_i32_1 = arith.constant 0 : i32
    return %arg0, %c0_i32, %c0_i32_0 : i32, i32, i32
  }
  func.func @transform_8(%arg0: i32, %arg1: memref<2xi32, #tpu.memory_space<smem>>) -> (i32, i32, i32) {
    %c0_i32 = arith.constant 0 : i32
    %c0_i32_0 = arith.constant 0 : i32
    %c0_i32_1 = arith.constant 0 : i32
    return %arg0, %c0_i32, %c0_i32_0 : i32, i32, i32
  }
  func.func @transform_9(%arg0: i32, %arg1: memref<2xi32, #tpu.memory_space<smem>>) -> (i32, i32, i32) {
    %c0_i32 = arith.constant 0 : i32
    %c0_i32_0 = arith.constant 0 : i32
    %c0_i32_1 = arith.constant 0 : i32
    return %arg0, %c0_i32, %c0_i32_0 : i32, i32, i32
  }
  func.func @transform_10(%arg0: i32, %arg1: memref<2xi32, #tpu.memory_space<smem>>) -> (i32, i32, i32) {
    %c0_i32 = arith.constant 0 : i32
    %c0_i32_0 = arith.constant 0 : i32
    %c0_i32_1 = arith.constant 0 : i32
    return %arg0, %c0_i32, %c0_i32_0 : i32, i32, i32
  }
  func.func @transform_11(%arg0: i32, %arg1: memref<2xi32, #tpu.memory_space<smem>>) -> (i32, i32, i32) {
    %c0_i32 = arith.constant 0 : i32
    %c0_i32_0 = arith.constant 0 : i32
    %c0_i32_1 = arith.constant 0 : i32
    return %arg0, %c0_i32, %c0_i32_0 : i32, i32, i32
  }
  func.func @transform_12(%arg0: i32, %arg1: memref<2xi32, #tpu.memory_space<smem>>) -> (i32, i32, i32) {
    %c0_i32 = arith.constant 0 : i32
    %c0_i32_0 = arith.constant 0 : i32
    %c0_i32_1 = arith.constant 0 : i32
    return %arg0, %c0_i32, %c0_i32_0 : i32, i32, i32
  }
  func.func @transform_13(%arg0: i32, %arg1: memref<2xi32, #tpu.memory_space<smem>>) -> (i32, i32, i32) {
    %c0_i32 = arith.constant 0 : i32
    %c0_i32_0 = arith.constant 0 : i32
    %c0_i32_1 = arith.constant 0 : i32
    return %arg0, %c0_i32, %c0_i32_0 : i32, i32, i32
  }
  func.func @transform_14(%arg0: i32, %arg1: memref<2xi32, #tpu.memory_space<smem>>) -> (i32, i32, i32) {
    %c0_i32 = arith.constant 0 : i32
    %c0_i32_0 = arith.constant 0 : i32
    %c0_i32_1 = arith.constant 0 : i32
    return %arg0, %c0_i32, %c0_i32_0 : i32, i32, i32
  }
  func.func @transform_15(%arg0: i32, %arg1: memref<2xi32, #tpu.memory_space<smem>>) -> (i32, i32) {
    %c0_i32 = arith.constant 0 : i32
    %c0_i32_0 = arith.constant 0 : i32
    %c0_i32_1 = arith.constant 0 : i32
    return %c0_i32, %c0_i32_0 : i32, i32
  }
  func.func @transform_16(%arg0: i32, %arg1: memref<2xi32, #tpu.memory_space<smem>>) -> (i32, i32) {
    %c0_i32 = arith.constant 0 : i32
    %c0_i32_0 = arith.constant 0 : i32
    %c0_i32_1 = arith.constant 0 : i32
    return %c0_i32, %c0_i32_0 : i32, i32
  }
  func.func @transform_17(%arg0: i32, %arg1: memref<2xi32, #tpu.memory_space<smem>>) -> (i32, i32) {
    %c0_i32 = arith.constant 0 : i32
    %c0_i32_0 = arith.constant 0 : i32
    %c0_i32_1 = arith.constant 0 : i32
    return %c0_i32, %c0_i32_0 : i32, i32
  }
  func.func @transform_18(%arg0: i32, %arg1: memref<2xi32, #tpu.memory_space<smem>>) -> (i32, i32) {
    %c0_i32 = arith.constant 0 : i32
    %c0_i32_0 = arith.constant 0 : i32
    %c0_i32_1 = arith.constant 0 : i32
    return %c0_i32, %c0_i32_0 : i32, i32
  }
  func.func @transform_19(%arg0: i32, %arg1: memref<2xi32, #tpu.memory_space<smem>>) -> (i32, i32) {
    %c0_i32 = arith.constant 0 : i32
    %c0_i32_0 = arith.constant 0 : i32
    %c0_i32_1 = arith.constant 0 : i32
    return %c0_i32, %c0_i32_0 : i32, i32
  }
}

</mosaic_0001>

<llo_original>
// kernel: tpu_custom_call.1
$region0: #{tpu_custom_call.1}
  #allocation0 [shape = 'u32[]', space=smem, size = 0x4, offset = 0x4, fixed_abs, tag = 'smem constant byte address 0x4 - core index']
  #allocation1 [shape = 'u32[72,128]{1,0:T(1,128)}', space=vmem, size = 0x9000, scoped, tag = 'internal scratch']
  #allocation2 [shape = 'f32[16,32]{1,0:T(8,128)}', space=vmem, size = 0x2000, scoped, tag = 'scratch operand']
  #allocation3 [shape = 'f32[2,8,32]{2,1,0:T(8,128)}', space=vmem, size = 0x2000, scoped, tag = 'scratch operand']
  #allocation4 [shape = 's32[1]{0}', space=sflag, size = 0x4, scoped, tag = 'scoped memory for tpu_custom_call.1']
  #allocation5 [shape = 'u8[512]{0}', space=smem, size = 0x200, scoped, tag = 'prefetched SMEM operand 0']
  %s0 = inlined_call_operand.hbm [shape: s32[2], index: 0, kind: input, shape index: {}]
  %s1 = inlined_call_operand.hbm [shape: f32[16,32], index: 1, kind: input, shape index: {}]
  %s2 = inlined_call_operand.vmem [shape: f32[1,32], index: 2, kind: input, shape index: {}]
  %s3 = inlined_call_operand.hbm [shape: f32[1,32], index: 3, kind: input, shape index: {}]
  %s4 = inlined_call_operand.vmem [shape: bf16[2,32,96], index: 4, kind: input, shape index: {}]
  %s5 = inlined_call_operand.hbm [shape: f32[2,1,96], index: 5, kind: input, shape index: {}]
  %s6 = inlined_call_operand.vmem [shape: bf16[2,32,32], index: 6, kind: input, shape index: {}]
  %s7 = inlined_call_operand.hbm [shape: f32[2,1,32], index: 7, kind: input, shape index: {}]
  %s8 = inlined_call_operand.vmem [shape: bf16[2,32,64], index: 8, kind: input, shape index: {}]
  %s9 = inlined_call_operand.hbm [shape: f32[2,1,64], index: 9, kind: input, shape index: {}]
  %s10 = inlined_call_operand.vmem [shape: bf16[2,64,32], index: 10, kind: input, shape index: {}]
  %s11 = inlined_call_operand.hbm [shape: f32[2,1,32], index: 11, kind: input, shape index: {}]
  %s12 = inlined_call_operand.hbm [shape: f32[2,1,32], index: 12, kind: input, shape index: {}]
  %s13 = inlined_call_operand.hbm [shape: f32[2,1,32], index: 13, kind: input, shape index: {}]
  %s14 = inlined_call_operand.hbm [shape: f32[2,1,32], index: 14, kind: input, shape index: {}]
  %s15 = inlined_call_operand.hbm [shape: f32[2,1,32], index: 15, kind: input, shape index: {}]
  %s16 = inlined_call_operand.hbm [shape: bf16[32,32], index: 16, kind: input, shape index: {}]
  %s17 = inlined_call_operand.hbm [shape: f32[1,32], index: 17, kind: input, shape index: {}]
  %s18 = inlined_call_operand.vmem [shape: bf16[32,128], index: 18, kind: input, shape index: {}]
  %s19 = inlined_call_operand.hbm [shape: f32[1,128], index: 19, kind: input, shape index: {}]
  %s20 = inlined_call_operand.hbm [shape: f32[2,128], index: 20, kind: output, shape index: {}]
  %s21 = sld [smem:[#allocation0]]
  $region169: #{tpu_custom_call.1} parent=0
    _
  %s23 = ssub.s32 1, %s21
  %s24 = scalar_select 0, %s23, %s21
  %s26 = sshll.u32 %s0, 4
  %s27 = int_to_ptr.hbm [resolvable:$true] %s26
  %29 = dma.hbm_to_smem %s27, 16, [#allocation5], [#allocation4]
  %31 = dma.done [#allocation4], 16
  %32 = sfence
  $region1: #{tpu_custom_call.1} parent=0
    #allocation6 [shape = 'u8[8192]{0}', space=vmem, size = 0x2000, scoped, tag = 'input window, operand 1, single buffered']
    #allocation7 [shape = 's32[2]{0}', space=sflag, size = 0x8, scoped, tag = 'scoped memory for tpu_custom_call.1']
    #allocation8 [shape = 's32[2]{0}', space=sflag, size = 0x8, scoped, tag = 'scoped memory for tpu_custom_call.1']
    #allocation9 [shape = 'u8[512]{0}', space=vmem, size = 0x400, scoped, tag = 'input window, operand 3, single buffered']
    #allocation10 [shape = 's32[1]{0}', space=sflag, size = 0x4, scoped, tag = 'scoped memory for tpu_custom_call.1']
    #allocation11 [shape = 'u8[1024]{0}', space=vmem, size = 0x400, scoped, tag = 'input window, operand 5']
    #allocation12 [shape = 'u8[1024]{0}', space=vmem, size = 0x400, scoped, tag = 'input window, operand 7']
    #allocation13 [shape = 'u8[1024]{0}', space=vmem, size = 0x400, scoped, tag = 'input window, operand 9']
    #allocation14 [shape = 'u8[1024]{0}', space=vmem, size = 0x400, scoped, tag = 'input window, operand 11']
    #allocation15 [shape = 'u8[1024]{0}', space=vmem, size = 0x400, scoped, tag = 'input window, operand 12']
    #allocation16 [shape = 'u8[1024]{0}', space=vmem, size = 0x400, scoped, tag = 'input window, operand 13']
    #allocation17 [shape = 'u8[1024]{0}', space=vmem, size = 0x400, scoped, tag = 'input window, operand 14']
    #allocation18 [shape = 'u8[1024]{0}', space=vmem, size = 0x400, scoped, tag = 'input window, operand 15']
    #allocation19 [shape = 'u8[8192]{0}', space=vmem, size = 0x2000, scoped, tag = 'input window, operand 16, single buffered']
    #allocation20 [shape = 'u8[512]{0}', space=vmem, size = 0x400, scoped, tag = 'input window, operand 17, single buffered']
    #allocation21 [shape = 's32[1]{0}', space=sflag, size = 0x4, scoped, tag = 'scoped memory for tpu_custom_call.1']
    #allocation22 [shape = 'u8[512]{0}', space=vmem, size = 0x400, scoped, tag = 'input window, operand 19, single buffered']
    #allocation23 [shape = 'u8[1024]{0}', space=vmem, size = 0x400, scoped, tag = 'output window, operand 0, single buffered']
    %33 = vsyncpa [#allocation7], 0
    %34 = vsyncpa [#allocation10], 0
    %35 = vsyncpa [#allocation21], 0
    %36 = vsyncpa [#allocation8], 0
    loop: start=0, step=1, limit=4
    $region2: #{tpu_custom_call.1} parent=1 // loop_pre_header
      _
    $region3: #{tpu_custom_call.1} parent=1 // loop_header
      %s38 = sphi 0, %s42
      %p39 = scmp.ge.s32.totalorder %s38, 4
      %s46 = sphi 0, %s46
      %s48 = sphi 0, %s46
      %s49 = sphi 0, %s48
      %s63 = sphi 0, %s49
      %s67 = sphi 0, %s67
      %s69 = sphi 0, %s67
      %s70 = sphi 0, %s69
      %s84 = sphi 0, %s70
      %s88 = sphi 0, %s88
      %s90 = sphi 0, %s88
      %s91 = sphi 0, %s90
      %s105 = sphi 0, %s91
      %s111 = sphi 0, %s113
      %s114 = sphi 0, %s111
      %s115 = sphi 0, %s114
      %s131 = sphi 0, %s115
      %s137 = sphi 0, %s139
      %s140 = sphi 0, %s137
      %s141 = sphi 0, %s140
      %s157 = sphi 0, %s141
      %s163 = sphi 0, %s165
      %s166 = sphi 0, %s163
      %s167 = sphi 0, %s166
      %s183 = sphi 0, %s167
      %s189 = sphi 0, %s191
      %s192 = sphi 0, %s189
      %s193 = sphi 0, %s192
      %s209 = sphi 0, %s193
      %s215 = sphi 0, %s217
      %s218 = sphi 0, %s215
      %s219 = sphi 0, %s218
      %s235 = sphi 0, %s219
      %s241 = sphi 0, %s243
      %s244 = sphi 0, %s241
      %s245 = sphi 0, %s244
      %s261 = sphi 0, %s245
      %s267 = sphi 0, %s269
      %s270 = sphi 0, %s267
      %s271 = sphi 0, %s270
      %s287 = sphi 0, %s271
      %s293 = sphi 0, %s295
      %s296 = sphi 0, %s293
      %s297 = sphi 0, %s296
      %s313 = sphi 0, %s297
      %s319 = sphi 0, %s321
      %s322 = sphi 0, %s319
      %s323 = sphi 0, %s322
      %s339 = sphi 0, %s323
      %s345 = sphi 0, %s347
      %s348 = sphi 0, %s345
      %s349 = sphi 0, %s348
      %s365 = sphi 0, %s349
      %s371 = sphi 0, %s373
      %s374 = sphi 0, %s371
      %s375 = sphi 0, %s374
      %s391 = sphi 0, %s375
      %s397 = sphi 0, %s399
      %s400 = sphi 0, %s397
      %s401 = sphi 0, %s400
      %s417 = sphi 0, %s401
      %s421 = sphi 0, %s421
      %s423 = sphi 0, %s421
      %s424 = sphi 0, %s423
      %s438 = sphi 0, %s424
      %s442 = sphi 0, %s442
      %s444 = sphi 0, %s442
      %s445 = sphi 0, %s444
      %s459 = sphi 0, %s445
      %s463 = sphi 0, %s463
      %s465 = sphi 0, %s463
      %s466 = sphi 0, %s465
      %s480 = sphi 0, %s466
      %s484 = sphi 0, %s484
      %s486 = sphi 0, %s484
      %s487 = sphi 0, %s486
      %s501 = sphi 0, %s487
      %s505 = sphi 0, %s505
      %s507 = sphi 0, %s505
      %s508 = sphi 0, %s507
      %s522 = sphi 0, %s508
    $region4: #{tpu_custom_call.1} parent=1 // loop_header_branch
      %41 = sbr.rel (%p39) target = $region8
    $region5: #{tpu_custom_call.1} parent=1 // loop_body
      %s43 = ssub.s32 %s38, 1
      %s44 = ssub.s32 %s38, 2
      %s45 = sadd.s32 %s38, 1
      %s47 = sadd.s32 %s46, 1
      %p50 = scmp.eq.s32.totalorder %s38, 1
      %p51 = scmp.ne.s32.totalorder %s46, %s48
      %p52 = scmp.eq.s32.totalorder %s38, 0
      %p53 = por %p51, %p52
      %p54 = scmp.ne.s32.totalorder %s46, %s48
      %p55 = scmp.eq.s32.totalorder %s43, 1
      %p56 = por %p54, %p55
      %p57 = scmp.ne.s32.totalorder %s48, %s49
      %p58 = scmp.eq.s32.totalorder %s43, 0
      %p59 = por %p57, %p58
      %p60 = scmp.ne.s32.totalorder %s48, %s49
      %p61 = scmp.eq.s32.totalorder %s44, 1
      %p62 = por %p60, %p61
      %p64 = scmp.ne.s32.totalorder %s49, %s63
      %p65 = scmp.eq.s32.totalorder %s44, 0
      %p66 = por %p64, %p65
      %s68 = sadd.s32 %s67, 1
      %p71 = scmp.eq.s32.totalorder %s38, 1
      %p72 = scmp.ne.s32.totalorder %s67, %s69
      %p73 = scmp.eq.s32.totalorder %s38, 0
      %p74 = por %p72, %p73
      %p75 = scmp.ne.s32.totalorder %s67, %s69
      %p76 = scmp.eq.s32.totalorder %s43, 1
      %p77 = por %p75, %p76
      %p78 = scmp.ne.s32.totalorder %s69, %s70
      %p79 = scmp.eq.s32.totalorder %s43, 0
      %p80 = por %p78, %p79
      %p81 = scmp.ne.s32.totalorder %s69, %s70
      %p82 = scmp.eq.s32.totalorder %s44, 1
      %p83 = por %p81, %p82
      %p85 = scmp.ne.s32.totalorder %s70, %s84
      %p86 = scmp.eq.s32.totalorder %s44, 0
      %p87 = por %p85, %p86
      %s89 = sadd.s32 %s88, 1
      %p92 = scmp.eq.s32.totalorder %s38, 1
      %p93 = scmp.ne.s32.totalorder %s88, %s90
      %p94 = scmp.eq.s32.totalorder %s38, 0
      %p95 = por %p93, %p94
      %p96 = scmp.ne.s32.totalorder %s88, %s90
      %p97 = scmp.eq.s32.totalorder %s43, 1
      %p98 = por %p96, %p97
      %p99 = scmp.ne.s32.totalorder %s90, %s91
      %p100 = scmp.eq.s32.totalorder %s43, 0
      %p101 = por %p99, %p100
      %p102 = scmp.ne.s32.totalorder %s90, %s91
      %p103 = scmp.eq.s32.totalorder %s44, 1
      %p104 = por %p102, %p103
      %p106 = scmp.ne.s32.totalorder %s91, %s105
      %p107 = scmp.eq.s32.totalorder %s44, 0
      %p108 = por %p106, %p107
      %s109 = ssub.s32 %s38, %s45
      %p110 = scmp.eq.s32.totalorder %s109, 0
      %s112 = sadd.s32 %s111, 1
      %s113 = scalar_select %p110, %s111, %s112
      %p116 = pneg %p110
      %p117 = scmp.eq.s32.totalorder %s38, 1
      %p118 = por %p116, %p117
      %p119 = scmp.ne.s32.totalorder %s111, %s114
      %p120 = scmp.eq.s32.totalorder %s38, 0
      %p121 = por %p119, %p120
      %p122 = scmp.ne.s32.totalorder %s111, %s114
      %p123 = scmp.eq.s32.totalorder %s43, 1
      %p124 = por %p122, %p123
      %p125 = scmp.ne.s32.totalorder %s114, %s115
      %p126 = scmp.eq.s32.totalorder %s43, 0
      %p127 = por %p125, %p126
      %p128 = scmp.ne.s32.totalorder %s114, %s115
      %p129 = scmp.eq.s32.totalorder %s44, 1
      %p130 = por %p128, %p129
      %p132 = scmp.ne.s32.totalorder %s115, %s131
      %p133 = scmp.eq.s32.totalorder %s44, 0
      %p134 = por %p132, %p133
      %s135 = ssub.s32 %s38, %s45
      %p136 = scmp.eq.s32.totalorder %s135, 0
      %s138 = sadd.s32 %s137, 1
      %s139 = scalar_select %p136, %s137, %s138
      %p142 = pneg %p136
      %p143 = scmp.eq.s32.totalorder %s38, 1
      %p144 = por %p142, %p143
      %p145 = scmp.ne.s32.totalorder %s137, %s140
      %p146 = scmp.eq.s32.totalorder %s38, 0
      %p147 = por %p145, %p146
      %p148 = scmp.ne.s32.totalorder %s137, %s140
      %p149 = scmp.eq.s32.totalorder %s43, 1
      %p150 = por %p148, %p149
      %p151 = scmp.ne.s32.totalorder %s140, %s141
      %p152 = scmp.eq.s32.totalorder %s43, 0
      %p153 = por %p151, %p152
      %p154 = scmp.ne.s32.totalorder %s140, %s141
      %p155 = scmp.eq.s32.totalorder %s44, 1
      %p156 = por %p154, %p155
      %p158 = scmp.ne.s32.totalorder %s141, %s157
      %p159 = scmp.eq.s32.totalorder %s44, 0
      %p160 = por %p158, %p159
      %s161 = ssub.s32 %s38, %s45
      %p162 = scmp.eq.s32.totalorder %s161, 0
      %s164 = sadd.s32 %s163, 1
      %s165 = scalar_select %p162, %s163, %s164
      %p168 = pneg %p162
      %p169 = scmp.eq.s32.totalorder %s38, 1
      %p170 = por %p168, %p169
      %p171 = scmp.ne.s32.totalorder %s163, %s166
      %p172 = scmp.eq.s32.totalorder %s38, 0
      %p173 = por %p171, %p172
      %p174 = scmp.ne.s32.totalorder %s163, %s166
      %p175 = scmp.eq.s32.totalorder %s43, 1
      %p176 = por %p174, %p175
      %p177 = scmp.ne.s32.totalorder %s166, %s167
      %p178 = scmp.eq.s32.totalorder %s43, 0
      %p179 = por %p177, %p178
      %p180 = scmp.ne.s32.totalorder %s166, %s167
      %p181 = scmp.eq.s32.totalorder %s44, 1
      %p182 = por %p180, %p181
      %p184 = scmp.ne.s32.totalorder %s167, %s183
      %p185 = scmp.eq.s32.totalorder %s44, 0
      %p186 = por %p184, %p185
      %s187 = ssub.s32 %s38, %s45
      %p188 = scmp.eq.s32.totalorder %s187, 0
      %s190 = sadd.s32 %s189, 1
      %s191 = scalar_select %p188, %s189, %s190
      %p194 = pneg %p188
      %p195 = scmp.eq.s32.totalorder %s38, 1
      %p196 = por %p194, %p195
      %p197 = scmp.ne.s32.totalorder %s189, %s192
      %p198 = scmp.eq.s32.totalorder %s38, 0
      %p199 = por %p197, %p198
      %p200 = scmp.ne.s32.totalorder %s189, %s192
      %p201 = scmp.eq.s32.totalorder %s43, 1
      %p202 = por %p200, %p201
      %p203 = scmp.ne.s32.totalorder %s192, %s193
      %p204 = scmp.eq.s32.totalorder %s43, 0
      %p205 = por %p203, %p204
      %p206 = scmp.ne.s32.totalorder %s192, %s193
      %p207 = scmp.eq.s32.totalorder %s44, 1
      %p208 = por %p206, %p207
      %p210 = scmp.ne.s32.totalorder %s193, %s209
      %p211 = scmp.eq.s32.totalorder %s44, 0
      %p212 = por %p210, %p211
      %s213 = ssub.s32 %s38, %s45
      %p214 = scmp.eq.s32.totalorder %s213, 0
      %s216 = sadd.s32 %s215, 1
      %s217 = scalar_select %p214, %s215, %s216
      %p220 = pneg %p214
      %p221 = scmp.eq.s32.totalorder %s38, 1
      %p222 = por %p220, %p221
      %p223 = scmp.ne.s32.totalorder %s215, %s218
      %p224 = scmp.eq.s32.totalorder %s38, 0
      %p225 = por %p223, %p224
      %p226 = scmp.ne.s32.totalorder %s215, %s218
      %p227 = scmp.eq.s32.totalorder %s43, 1
      %p228 = por %p226, %p227
      %p229 = scmp.ne.s32.totalorder %s218, %s219
      %p230 = scmp.eq.s32.totalorder %s43, 0
      %p231 = por %p229, %p230
      %p232 = scmp.ne.s32.totalorder %s218, %s219
      %p233 = scmp.eq.s32.totalorder %s44, 1
      %p234 = por %p232, %p233
      %p236 = scmp.ne.s32.totalorder %s219, %s235
      %p237 = scmp.eq.s32.totalorder %s44, 0
      %p238 = por %p236, %p237
      %s239 = ssub.s32 %s38, %s45
      %p240 = scmp.eq.s32.totalorder %s239, 0
      %s242 = sadd.s32 %s241, 1
      %s243 = scalar_select %p240, %s241, %s242
      %p246 = pneg %p240
      %p247 = scmp.eq.s32.totalorder %s38, 1
      %p248 = por %p246, %p247
      %p249 = scmp.ne.s32.totalorder %s241, %s244
      %p250 = scmp.eq.s32.totalorder %s38, 0
      %p251 = por %p249, %p250
      %p252 = scmp.ne.s32.totalorder %s241, %s244
      %p253 = scmp.eq.s32.totalorder %s43, 1
      %p254 = por %p252, %p253
      %p255 = scmp.ne.s32.totalorder %s244, %s245
      %p256 = scmp.eq.s32.totalorder %s43, 0
      %p257 = por %p255, %p256
      %p258 = scmp.ne.s32.totalorder %s244, %s245
      %p259 = scmp.eq.s32.totalorder %s44, 1
      %p260 = por %p258, %p259
      %p262 = scmp.ne.s32.totalorder %s245, %s261
      %p263 = scmp.eq.s32.totalorder %s44, 0
      %p264 = por %p262, %p263
      %s265 = ssub.s32 %s38, %s45
      %p266 = scmp.eq.s32.totalorder %s265, 0
      %s268 = sadd.s32 %s267, 1
      %s269 = scalar_select %p266, %s267, %s268
      %p272 = pneg %p266
      %p273 = scmp.eq.s32.totalorder %s38, 1
      %p274 = por %p272, %p273
      %p275 = scmp.ne.s32.totalorder %s267, %s270
      %p276 = scmp.eq.s32.totalorder %s38, 0
      %p277 = por %p275, %p276
      %p278 = scmp.ne.s32.totalorder %s267, %s270
      %p279 = scmp.eq.s32.totalorder %s43, 1
      %p280 = por %p278, %p279
      %p281 = scmp.ne.s32.totalorder %s270, %s271
      %p282 = scmp.eq.s32.totalorder %s43, 0
      %p283 = por %p281, %p282
      %p284 = scmp.ne.s32.totalorder %s270, %s271
      %p285 = scmp.eq.s32.totalorder %s44, 1
      %p286 = por %p284, %p285
      %p288 = scmp.ne.s32.totalorder %s271, %s287
      %p289 = scmp.eq.s32.totalorder %s44, 0
      %p290 = por %p288, %p289
      %s291 = ssub.s32 %s38, %s45
      %p292 = scmp.eq.s32.totalorder %s291, 0
      %s294 = sadd.s32 %s293, 1
      %s295 = scalar_select %p292, %s293, %s294
      %p298 = pneg %p292
      %p299 = scmp.eq.s32.totalorder %s38, 1
      %p300 = por %p298, %p299
      %p301 = scmp.ne.s32.totalorder %s293, %s296
      %p302 = scmp.eq.s32.totalorder %s38, 0
      %p303 = por %p301, %p302
      %p304 = scmp.ne.s32.totalorder %s293, %s296
      %p305 = scmp.eq.s32.totalorder %s43, 1
      %p306 = por %p304, %p305
      %p307 = scmp.ne.s32.totalorder %s296, %s297
      %p308 = scmp.eq.s32.totalorder %s43, 0
      %p309 = por %p307, %p308
      %p310 = scmp.ne.s32.totalorder %s296, %s297
      %p311 = scmp.eq.s32.totalorder %s44, 1
      %p312 = por %p310, %p311
      %p314 = scmp.ne.s32.totalorder %s297, %s313
      %p315 = scmp.eq.s32.totalorder %s44, 0
      %p316 = por %p314, %p315
      %s317 = ssub.s32 %s38, %s45
      %p318 = scmp.eq.s32.totalorder %s317, 0
      %s320 = sadd.s32 %s319, 1
      %s321 = scalar_select %p318, %s319, %s320
      %p324 = pneg %p318
      %p325 = scmp.eq.s32.totalorder %s38, 1
      %p326 = por %p324, %p325
      %p327 = scmp.ne.s32.totalorder %s319, %s322
      %p328 = scmp.eq.s32.totalorder %s38, 0
      %p329 = por %p327, %p328
      %p330 = scmp.ne.s32.totalorder %s319, %s322
      %p331 = scmp.eq.s32.totalorder %s43, 1
      %p332 = por %p330, %p331
      %p333 = scmp.ne.s32.totalorder %s322, %s323
      %p334 = scmp.eq.s32.totalorder %s43, 0
      %p335 = por %p333, %p334
      %p336 = scmp.ne.s32.totalorder %s322, %s323
      %p337 = scmp.eq.s32.totalorder %s44, 1
      %p338 = por %p336, %p337
      %p340 = scmp.ne.s32.totalorder %s323, %s339
      %p341 = scmp.eq.s32.totalorder %s44, 0
      %p342 = por %p340, %p341
      %s343 = ssub.s32 %s38, %s45
      %p344 = scmp.eq.s32.totalorder %s343, 0
      %s346 = sadd.s32 %s345, 1
      %s347 = scalar_select %p344, %s345, %s346
      %p350 = pneg %p344
      %p351 = scmp.eq.s32.totalorder %s38, 1
      %p352 = por %p350, %p351
      %p353 = scmp.ne.s32.totalorder %s345, %s348
      %p354 = scmp.eq.s32.totalorder %s38, 0
      %p355 = por %p353, %p354
      %p356 = scmp.ne.s32.totalorder %s345, %s348
      %p357 = scmp.eq.s32.totalorder %s43, 1
      %p358 = por %p356, %p357
      %p359 = scmp.ne.s32.totalorder %s348, %s349
      %p360 = scmp.eq.s32.totalorder %s43, 0
      %p361 = por %p359, %p360
      %p362 = scmp.ne.s32.totalorder %s348, %s349
      %p363 = scmp.eq.s32.totalorder %s44, 1
      %p364 = por %p362, %p363
      %p366 = scmp.ne.s32.totalorder %s349, %s365
      %p367 = scmp.eq.s32.totalorder %s44, 0
      %p368 = por %p366, %p367
      %s369 = ssub.s32 %s38, %s45
      %p370 = scmp.eq.s32.totalorder %s369, 0
      %s372 = sadd.s32 %s371, 1
      %s373 = scalar_select %p370, %s371, %s372
      %p376 = pneg %p370
      %p377 = scmp.eq.s32.totalorder %s38, 1
      %p378 = por %p376, %p377
      %p379 = scmp.ne.s32.totalorder %s371, %s374
      %p380 = scmp.eq.s32.totalorder %s38, 0
      %p381 = por %p379, %p380
      %p382 = scmp.ne.s32.totalorder %s371, %s374
      %p383 = scmp.eq.s32.totalorder %s43, 1
      %p384 = por %p382, %p383
      %p385 = scmp.ne.s32.totalorder %s374, %s375
      %p386 = scmp.eq.s32.totalorder %s43, 0
      %p387 = por %p385, %p386
      %p388 = scmp.ne.s32.totalorder %s374, %s375
      %p389 = scmp.eq.s32.totalorder %s44, 1
      %p390 = por %p388, %p389
      %p392 = scmp.ne.s32.totalorder %s375, %s391
      %p393 = scmp.eq.s32.totalorder %s44, 0
      %p394 = por %p392, %p393
      %s395 = ssub.s32 %s38, %s45
      %p396 = scmp.eq.s32.totalorder %s395, 0
      %s398 = sadd.s32 %s397, 1
      %s399 = scalar_select %p396, %s397, %s398
      %p402 = pneg %p396
      %p403 = scmp.eq.s32.totalorder %s38, 1
      %p404 = por %p402, %p403
      %p405 = scmp.ne.s32.totalorder %s397, %s400
      %p406 = scmp.eq.s32.totalorder %s38, 0
      %p407 = por %p405, %p406
      %p408 = scmp.ne.s32.totalorder %s397, %s400
      %p409 = scmp.eq.s32.totalorder %s43, 1
      %p410 = por %p408, %p409
      %p411 = scmp.ne.s32.totalorder %s400, %s401
      %p412 = scmp.eq.s32.totalorder %s43, 0
      %p413 = por %p411, %p412
      %p414 = scmp.ne.s32.totalorder %s400, %s401
      %p415 = scmp.eq.s32.totalorder %s44, 1
      %p416 = por %p414, %p415
      %p418 = scmp.ne.s32.totalorder %s401, %s417
      %p419 = scmp.eq.s32.totalorder %s44, 0
      %p420 = por %p418, %p419
      %s422 = sadd.s32 %s421, 1
      %p425 = scmp.eq.s32.totalorder %s38, 1
      %p426 = scmp.ne.s32.totalorder %s421, %s423
      %p427 = scmp.eq.s32.totalorder %s38, 0
      %p428 = por %p426, %p427
      %p429 = scmp.ne.s32.totalorder %s421, %s423
      %p430 = scmp.eq.s32.totalorder %s43, 1
      %p431 = por %p429, %p430
      %p432 = scmp.ne.s32.totalorder %s423, %s424
      %p433 = scmp.eq.s32.totalorder %s43, 0
      %p434 = por %p432, %p433
      %p435 = scmp.ne.s32.totalorder %s423, %s424
      %p436 = scmp.eq.s32.totalorder %s44, 1
      %p437 = por %p435, %p436
      %p439 = scmp.ne.s32.totalorder %s424, %s438
      %p440 = scmp.eq.s32.totalorder %s44, 0
      %p441 = por %p439, %p440
      %s443 = sadd.s32 %s442, 1
      %p446 = scmp.eq.s32.totalorder %s38, 1
      %p447 = scmp.ne.s32.totalorder %s442, %s444
      %p448 = scmp.eq.s32.totalorder %s38, 0
      %p449 = por %p447, %p448
      %p450 = scmp.ne.s32.totalorder %s442, %s444
      %p451 = scmp.eq.s32.totalorder %s43, 1
      %p452 = por %p450, %p451
      %p453 = scmp.ne.s32.totalorder %s444, %s445
      %p454 = scmp.eq.s32.totalorder %s43, 0
      %p455 = por %p453, %p454
      %p456 = scmp.ne.s32.totalorder %s444, %s445
      %p457 = scmp.eq.s32.totalorder %s44, 1
      %p458 = por %p456, %p457
      %p460 = scmp.ne.s32.totalorder %s445, %s459
      %p461 = scmp.eq.s32.totalorder %s44, 0
      %p462 = por %p460, %p461
      %s464 = sadd.s32 %s463, 1
      %p467 = scmp.eq.s32.totalorder %s38, 1
      %p468 = scmp.ne.s32.totalorder %s463, %s465
      %p469 = scmp.eq.s32.totalorder %s38, 0
      %p470 = por %p468, %p469
      %p471 = scmp.ne.s32.totalorder %s463, %s465
      %p472 = scmp.eq.s32.totalorder %s43, 1
      %p473 = por %p471, %p472
      %p474 = scmp.ne.s32.totalorder %s465, %s466
      %p475 = scmp.eq.s32.totalorder %s43, 0
      %p476 = por %p474, %p475
      %p477 = scmp.ne.s32.totalorder %s465, %s466
      %p478 = scmp.eq.s32.totalorder %s44, 1
      %p479 = por %p477, %p478
      %p481 = scmp.ne.s32.totalorder %s466, %s480
      %p482 = scmp.eq.s32.totalorder %s44, 0
      %p483 = por %p481, %p482
      %s485 = sadd.s32 %s484, 1
      %p488 = scmp.eq.s32.totalorder %s38, 1
      %p489 = scmp.ne.s32.totalorder %s484, %s486
      %p490 = scmp.eq.s32.totalorder %s38, 0
      %p491 = por %p489, %p490
      %p492 = scmp.ne.s32.totalorder %s484, %s486
      %p493 = scmp.eq.s32.totalorder %s43, 1
      %p494 = por %p492, %p493
      %p495 = scmp.ne.s32.totalorder %s486, %s487
      %p496 = scmp.eq.s32.totalorder %s43, 0
      %p497 = por %p495, %p496
      %p498 = scmp.ne.s32.totalorder %s486, %s487
      %p499 = scmp.eq.s32.totalorder %s44, 1
      %p500 = por %p498, %p499
      %p502 = scmp.ne.s32.totalorder %s487, %s501
      %p503 = scmp.eq.s32.totalorder %s44, 0
      %p504 = por %p502, %p503
      %s506 = sadd.s32 %s505, 1
      %p509 = scmp.eq.s32.totalorder %s38, 1
      %p510 = scmp.ne.s32.totalorder %s505, %s507
      %p511 = scmp.eq.s32.totalorder %s38, 0
      %p512 = por %p510, %p511
      %p513 = scmp.ne.s32.totalorder %s505, %s507
      %p514 = scmp.eq.s32.totalorder %s43, 1
      %p515 = por %p513, %p514
      %p516 = scmp.ne.s32.totalorder %s507, %s508
      %p517 = scmp.eq.s32.totalorder %s43, 0
      %p518 = por %p516, %p517
      %p519 = scmp.ne.s32.totalorder %s507, %s508
      %p520 = scmp.eq.s32.totalorder %s44, 1
      %p521 = por %p519, %p520
      %p523 = scmp.ne.s32.totalorder %s508, %s522
      %p524 = scmp.eq.s32.totalorder %s44, 0
      %p525 = por %p523, %p524
      %p526 = scmp.le.s32.totalorder 1, %s38
      %p527 = scmp.lt.s32.totalorder %s38, 3
      %p528 = pnand %p526, %p527
      %p529 = pneg %p528
      // Predicated region
      $region9: #{tpu_custom_call.1} parent=5 // pred_check
        _
      $region10: #{tpu_custom_call.1} parent=5 // pred_check_branch
        %531 = sbr.rel (%p528) target = $region12
      $region11: #{tpu_custom_call.1} parent=5 // pred_region
        %s532 = ssub.s32 %s38, 1
        // Predicated region
        $region13: #{tpu_custom_call.1} parent=11 // pred_check
          %p533 = pneg %p59
        $region14: #{tpu_custom_call.1} parent=11 // pred_check_branch
          %535 = sbr.rel (%p533) target = $region16
        $region15: #{tpu_custom_call.1} parent=11 // pred_region
          %537 = vsyncadd [#allocation7], 0
          %s538 = sshll.u32 %s1, 4
          %s539 = int_to_ptr.hbm [resolvable:$true] %s538
          %s540 = sshll.u32 [#allocation6], 4
          %s541 = int_to_ptr.vmem [resolvable:$true] %s540
          %546 = dma.hbm_to_vmem [thread:$0]  %s539, 256, %s541, [#allocation7], 128, 128, 8
        $region16: #{tpu_custom_call.1} parent=11 // pred_fallthru
          _
        // Predicated region
        $region17: #{tpu_custom_call.1} parent=11 // pred_check
          %p547 = pneg %p80
        $region18: #{tpu_custom_call.1} parent=11 // pred_check_branch
          %549 = sbr.rel (%p547) target = $region20
        $region19: #{tpu_custom_call.1} parent=11 // pred_region
          _
        $region20: #{tpu_custom_call.1} parent=11 // pred_fallthru
          _
        // Predicated region
        $region21: #{tpu_custom_call.1} parent=11 // pred_check
          %p550 = pneg %p101
        $region22: #{tpu_custom_call.1} parent=11 // pred_check_branch
          %552 = sbr.rel (%p550) target = $region24
        $region23: #{tpu_custom_call.1} parent=11 // pred_region
          %554 = vsyncadd [#allocation10], 0
          %s556 = sshll.u32 %s3, 4
          %s557 = int_to_ptr.hbm [resolvable:$true] %s556
          %s558 = sshll.u32 [#allocation9], 4
          %s559 = int_to_ptr.vmem [resolvable:$true] %s558
          %561 = dma.hbm_to_vmem [thread:$0]  %s557, 16, %s559, [#allocation10]
        $region24: #{tpu_custom_call.1} parent=11 // pred_fallthru
          _
        // Predicated region
        $region25: #{tpu_custom_call.1} parent=11 // pred_check
          %p562 = pneg %p434
        $region26: #{tpu_custom_call.1} parent=11 // pred_check_branch
          %564 = sbr.rel (%p562) target = $region28
        $region27: #{tpu_custom_call.1} parent=11 // pred_region
          %566 = vsyncadd [#allocation10], 0
          %s567 = sshll.u32 %s16, 4
          %s568 = int_to_ptr.hbm [resolvable:$true] %s567
          %s569 = sshll.u32 [#allocation19], 4
          %s570 = int_to_ptr.vmem [resolvable:$true] %s569
          %575 = dma.hbm_to_vmem [thread:$0]  %s568, 256, %s570, [#allocation10], 64, 64, 4
        $region28: #{tpu_custom_call.1} parent=11 // pred_fallthru
          _
        // Predicated region
        $region29: #{tpu_custom_call.1} parent=11 // pred_check
          %p576 = pneg %p455
        $region30: #{tpu_custom_call.1} parent=11 // pred_check_branch
          %578 = sbr.rel (%p576) target = $region32
        $region31: #{tpu_custom_call.1} parent=11 // pred_region
          %580 = vsyncadd [#allocation21], 0
          %s582 = sshll.u32 %s17, 4
          %s583 = int_to_ptr.hbm [resolvable:$true] %s582
          %s584 = sshll.u32 [#allocation20], 4
          %s585 = int_to_ptr.vmem [resolvable:$true] %s584
          %587 = dma.hbm_to_vmem [thread:$0]  %s583, 16, %s585, [#allocation21]
        $region32: #{tpu_custom_call.1} parent=11 // pred_fallthru
          _
        // Predicated region
        $region33: #{tpu_custom_call.1} parent=11 // pred_check
          %p588 = pneg %p476
        $region34: #{tpu_custom_call.1} parent=11 // pred_check_branch
          %590 = sbr.rel (%p588) target = $region36
        $region35: #{tpu_custom_call.1} parent=11 // pred_region
          _
        $region36: #{tpu_custom_call.1} parent=11 // pred_fallthru
          _
        // Predicated region
        $region37: #{tpu_custom_call.1} parent=11 // pred_check
          %p591 = pneg %p497
        $region38: #{tpu_custom_call.1} parent=11 // pred_check_branch
          %593 = sbr.rel (%p591) target = $region40
        $region39: #{tpu_custom_call.1} parent=11 // pred_region
          %595 = vsyncadd [#allocation21], 0
          %s597 = sshll.u32 %s19, 4
          %s598 = int_to_ptr.hbm [resolvable:$true] %s597
          %s599 = sshll.u32 [#allocation22], 4
          %s600 = int_to_ptr.vmem [resolvable:$true] %s599
          %602 = dma.hbm_to_vmem [thread:$0]  %s598, 16, %s600, [#allocation21]
        $region40: #{tpu_custom_call.1} parent=11 // pred_fallthru
          _
      $region12: #{tpu_custom_call.1} parent=5 // pred_fallthru
        _
      %p603 = scmp.lt.s32.totalorder %s38, 2
      // Predicated region
      $region41: #{tpu_custom_call.1} parent=5 // pred_check
        %p604 = pneg %p603
      $region42: #{tpu_custom_call.1} parent=5 // pred_check_branch
        %606 = sbr.rel (%p604) target = $region44
      $region43: #{tpu_custom_call.1} parent=5 // pred_region
        // Predicated region
        $region45: #{tpu_custom_call.1} parent=43 // pred_check
          %p607 = pneg %p121
        $region46: #{tpu_custom_call.1} parent=43 // pred_check_branch
          %609 = sbr.rel (%p607) target = $region48
        $region47: #{tpu_custom_call.1} parent=43 // pred_region
          %p610 = scmp.lt.s32.totalorder %s38, 1
          %s611 = scalar_select %p610, %s38, 1
          %s612 = smul.addr %s611, 4
          %s613 = smul.addr %s612, 4
          %s614 = scalar_lea.vmem %s4, %s613
        $region48: #{tpu_custom_call.1} parent=43 // pred_fallthru
          _
        // Predicated region
        $region49: #{tpu_custom_call.1} parent=43 // pred_check
          %p615 = pneg %p147
        $region50: #{tpu_custom_call.1} parent=43 // pred_check_branch
          %617 = sbr.rel (%p615) target = $region52
        $region51: #{tpu_custom_call.1} parent=43 // pred_region
          %s618 = sand.u32 %s38, 1
          %s619 = scalar_lea.sflag [#allocation7], %s618
          %s620 = sand.u32 %s137, 1
          %s621 = scalar_lea.vmem [#allocation11], %s620
          %623 = vsyncadd %s619, 0
          %s624 = scalar_lea.hbm %s5, %s38
          %s626 = sshll.u32 %s624, 4
          %s627 = int_to_ptr.hbm [resolvable:$true] %s626
          %s628 = sshll.u32 %s621, 4
          %s629 = int_to_ptr.vmem [resolvable:$true] %s628
          %631 = dma.hbm_to_vmem [thread:$0]  %s627, 16, %s629, %s619
        $region52: #{tpu_custom_call.1} parent=43 // pred_fallthru
          _
        // Predicated region
        $region53: #{tpu_custom_call.1} parent=43 // pred_check
          %p632 = pneg %p173
        $region54: #{tpu_custom_call.1} parent=43 // pred_check_branch
          %634 = sbr.rel (%p632) target = $region56
        $region55: #{tpu_custom_call.1} parent=43 // pred_region
          %p635 = scmp.lt.s32.totalorder %s38, 1
          %s636 = scalar_select %p635, %s38, 1
          %s637 = smul.addr %s636, 4
          %s638 = smul.addr %s637, 4
          %s639 = scalar_lea.vmem %s6, %s638
        $region56: #{tpu_custom_call.1} parent=43 // pred_fallthru
          _
        // Predicated region
        $region57: #{tpu_custom_call.1} parent=43 // pred_check
          %p640 = pneg %p199
        $region58: #{tpu_custom_call.1} parent=43 // pred_check_branch
          %642 = sbr.rel (%p640) target = $region60
        $region59: #{tpu_custom_call.1} parent=43 // pred_region
          %s643 = sand.u32 %s38, 1
          %s644 = scalar_lea.sflag [#allocation7], %s643
          %s645 = sand.u32 %s189, 1
          %s646 = scalar_lea.vmem [#allocation12], %s645
          %648 = vsyncadd %s644, 0
          %s649 = scalar_lea.hbm %s7, %s38
          %s651 = sshll.u32 %s649, 4
          %s652 = int_to_ptr.hbm [resolvable:$true] %s651
          %s653 = sshll.u32 %s646, 4
          %s654 = int_to_ptr.vmem [resolvable:$true] %s653
          %656 = dma.hbm_to_vmem [thread:$0]  %s652, 16, %s654, %s644
        $region60: #{tpu_custom_call.1} parent=43 // pred_fallthru
          _
        // Predicated region
        $region61: #{tpu_custom_call.1} parent=43 // pred_check
          %p657 = pneg %p225
        $region62: #{tpu_custom_call.1} parent=43 // pred_check_branch
          %659 = sbr.rel (%p657) target = $region64
        $region63: #{tpu_custom_call.1} parent=43 // pred_region
          %p660 = scmp.lt.s32.totalorder %s38, 1
          %s661 = scalar_select %p660, %s38, 1
          %s662 = smul.addr %s661, 4
          %s663 = smul.addr %s662, 4
          %s664 = scalar_lea.vmem %s8, %s663
        $region64: #{tpu_custom_call.1} parent=43 // pred_fallthru
          _
        // Predicated region
        $region65: #{tpu_custom_call.1} parent=43 // pred_check
          %p665 = pneg %p251
        $region66: #{tpu_custom_call.1} parent=43 // pred_check_branch
          %667 = sbr.rel (%p665) target = $region68
        $region67: #{tpu_custom_call.1} parent=43 // pred_region
          %s668 = sand.u32 %s38, 1
          %s669 = scalar_lea.sflag [#allocation7], %s668
          %s670 = sand.u32 %s241, 1
          %s671 = scalar_lea.vmem [#allocation13], %s670
          %673 = vsyncadd %s669, 0
          %s674 = scalar_lea.hbm %s9, %s38
          %s676 = sshll.u32 %s674, 4
          %s677 = int_to_ptr.hbm [resolvable:$true] %s676
          %s678 = sshll.u32 %s671, 4
          %s679 = int_to_ptr.vmem [resolvable:$true] %s678
          %681 = dma.hbm_to_vmem [thread:$0]  %s677, 16, %s679, %s669
        $region68: #{tpu_custom_call.1} parent=43 // pred_fallthru
          _
        // Predicated region
        $region69: #{tpu_custom_call.1} parent=43 // pred_check
          %p682 = pneg %p277
        $region70: #{tpu_custom_call.1} parent=43 // pred_check_branch
          %684 = sbr.rel (%p682) target = $region72
        $region71: #{tpu_custom_call.1} parent=43 // pred_region
          %p685 = scmp.lt.s32.totalorder %s38, 1
          %s686 = scalar_select %p685, %s38, 1
          %s687 = smul.addr %s686, 8
          %s688 = smul.addr %s687, 4
          %s689 = scalar_lea.vmem %s10, %s688
        $region72: #{tpu_custom_call.1} parent=43 // pred_fallthru
          _
        // Predicated region
        $region73: #{tpu_custom_call.1} parent=43 // pred_check
          %p690 = pneg %p303
        $region74: #{tpu_custom_call.1} parent=43 // pred_check_branch
          %692 = sbr.rel (%p690) target = $region76
        $region75: #{tpu_custom_call.1} parent=43 // pred_region
          %s693 = sand.u32 %s38, 1
          %s694 = scalar_lea.sflag [#allocation7], %s693
          %s695 = sand.u32 %s293, 1
          %s696 = scalar_lea.vmem [#allocation14], %s695
          %698 = vsyncadd %s694, 0
          %s699 = scalar_lea.hbm %s11, %s38
          %s701 = sshll.u32 %s699, 4
          %s702 = int_to_ptr.hbm [resolvable:$true] %s701
          %s703 = sshll.u32 %s696, 4
          %s704 = int_to_ptr.vmem [resolvable:$true] %s703
          %706 = dma.hbm_to_vmem [thread:$0]  %s702, 16, %s704, %s694
        $region76: #{tpu_custom_call.1} parent=43 // pred_fallthru
          _
        // Predicated region
        $region77: #{tpu_custom_call.1} parent=43 // pred_check
          %p707 = pneg %p329
        $region78: #{tpu_custom_call.1} parent=43 // pred_check_branch
          %709 = sbr.rel (%p707) target = $region80
        $region79: #{tpu_custom_call.1} parent=43 // pred_region
          %s710 = sand.u32 %s38, 1
          %s711 = scalar_lea.sflag [#allocation7], %s710
          %s712 = sand.u32 %s319, 1
          %s713 = scalar_lea.vmem [#allocation15], %s712
          %715 = vsyncadd %s711, 0
          %s716 = scalar_lea.hbm %s12, %s38
          %s718 = sshll.u32 %s716, 4
          %s719 = int_to_ptr.hbm [resolvable:$true] %s718
          %s720 = sshll.u32 %s713, 4
          %s721 = int_to_ptr.vmem [resolvable:$true] %s720
          %723 = dma.hbm_to_vmem [thread:$0]  %s719, 16, %s721, %s711
        $region80: #{tpu_custom_call.1} parent=43 // pred_fallthru
          _
        // Predicated region
        $region81: #{tpu_custom_call.1} parent=43 // pred_check
          %p724 = pneg %p355
        $region82: #{tpu_custom_call.1} parent=43 // pred_check_branch
          %726 = sbr.rel (%p724) target = $region84
        $region83: #{tpu_custom_call.1} parent=43 // pred_region
          %s727 = sand.u32 %s38, 1
          %s728 = scalar_lea.sflag [#allocation7], %s727
          %s729 = sand.u32 %s345, 1
          %s730 = scalar_lea.vmem [#allocation16], %s729
          %732 = vsyncadd %s728, 0
          %s733 = scalar_lea.hbm %s13, %s38
          %s735 = sshll.u32 %s733, 4
          %s736 = int_to_ptr.hbm [resolvable:$true] %s735
          %s737 = sshll.u32 %s730, 4
          %s738 = int_to_ptr.vmem [resolvable:$true] %s737
          %740 = dma.hbm_to_vmem [thread:$0]  %s736, 16, %s738, %s728
        $region84: #{tpu_custom_call.1} parent=43 // pred_fallthru
          _
        // Predicated region
        $region85: #{tpu_custom_call.1} parent=43 // pred_check
          %p741 = pneg %p381
        $region86: #{tpu_custom_call.1} parent=43 // pred_check_branch
          %743 = sbr.rel (%p741) target = $region88
        $region87: #{tpu_custom_call.1} parent=43 // pred_region
          %s744 = sand.u32 %s38, 1
          %s745 = scalar_lea.sflag [#allocation7], %s744
          %s746 = sand.u32 %s371, 1
          %s747 = scalar_lea.vmem [#allocation17], %s746
          %749 = vsyncadd %s745, 0
          %s750 = scalar_lea.hbm %s14, %s38
          %s752 = sshll.u32 %s750, 4
          %s753 = int_to_ptr.hbm [resolvable:$true] %s752
          %s754 = sshll.u32 %s747, 4
          %s755 = int_to_ptr.vmem [resolvable:$true] %s754
          %757 = dma.hbm_to_vmem [thread:$0]  %s753, 16, %s755, %s745
        $region88: #{tpu_custom_call.1} parent=43 // pred_fallthru
          _
        // Predicated region
        $region89: #{tpu_custom_call.1} parent=43 // pred_check
          %p758 = pneg %p407
        $region90: #{tpu_custom_call.1} parent=43 // pred_check_branch
          %760 = sbr.rel (%p758) target = $region92
        $region91: #{tpu_custom_call.1} parent=43 // pred_region
          %s761 = sand.u32 %s38, 1
          %s762 = scalar_lea.sflag [#allocation7], %s761
          %s763 = sand.u32 %s397, 1
          %s764 = scalar_lea.vmem [#allocation18], %s763
          %766 = vsyncadd %s762, 0
          %s767 = scalar_lea.hbm %s15, %s38
          %s769 = sshll.u32 %s767, 4
          %s770 = int_to_ptr.hbm [resolvable:$true] %s769
          %s771 = sshll.u32 %s764, 4
          %s772 = int_to_ptr.vmem [resolvable:$true] %s771
          %774 = dma.hbm_to_vmem [thread:$0]  %s770, 16, %s772, %s762
        $region92: #{tpu_custom_call.1} parent=43 // pred_fallthru
          _
      $region44: #{tpu_custom_call.1} parent=5 // pred_fallthru
        _
      %p775 = scmp.le.s32.totalorder 1, %s38
      %p776 = scmp.lt.s32.totalorder %s38, 3
      %p777 = pnand %p775, %p776
      %p778 = pneg %p777
      // Predicated region
      $region93: #{tpu_custom_call.1} parent=5 // pred_check
        _
      $region94: #{tpu_custom_call.1} parent=5 // pred_check_branch
        %780 = sbr.rel (%p777) target = $region96
      $region95: #{tpu_custom_call.1} parent=5 // pred_region
        %s781 = ssub.s32 %s38, 1
        // Predicated region
        $region97: #{tpu_custom_call.1} parent=95 // pred_check
          %p782 = pneg %p59
        $region98: #{tpu_custom_call.1} parent=95 // pred_check_branch
          %784 = sbr.rel (%p782) target = $region100
        $region99: #{tpu_custom_call.1} parent=95 // pred_region
          %786 = dma.done [#allocation7], 256
        $region100: #{tpu_custom_call.1} parent=95 // pred_fallthru
          _
        // Predicated region
        $region101: #{tpu_custom_call.1} parent=95 // pred_check
          %p787 = pneg %p101
        $region102: #{tpu_custom_call.1} parent=95 // pred_check_branch
          %789 = sbr.rel (%p787) target = $region104
        $region103: #{tpu_custom_call.1} parent=95 // pred_region
          %791 = dma.done [#allocation10], 16
        $region104: #{tpu_custom_call.1} parent=95 // pred_fallthru
          _
        %s792 = sand.u32 %s43, 1
        %s793 = scalar_lea.sflag [#allocation7], %s792
        %s794 = sand.u32 %s140, 1
        %s795 = scalar_lea.vmem [#allocation11], %s794
        // Predicated region
        $region105: #{tpu_custom_call.1} parent=95 // pred_check
          %p796 = pneg %p153
        $region106: #{tpu_custom_call.1} parent=95 // pred_check_branch
          %798 = sbr.rel (%p796) target = $region108
        $region107: #{tpu_custom_call.1} parent=95 // pred_region
          %800 = dma.done %s793, 16
        $region108: #{tpu_custom_call.1} parent=95 // pred_fallthru
          _
        %s801 = sand.u32 %s43, 1
        %s802 = scalar_lea.sflag [#allocation7], %s801
        %s803 = sand.u32 %s192, 1
        %s804 = scalar_lea.vmem [#allocation12], %s803
        // Predicated region
        $region109: #{tpu_custom_call.1} parent=95 // pred_check
          %p805 = pneg %p205
        $region110: #{tpu_custom_call.1} parent=95 // pred_check_branch
          %807 = sbr.rel (%p805) target = $region112
        $region111: #{tpu_custom_call.1} parent=95 // pred_region
          %809 = dma.done %s802, 16
        $region112: #{tpu_custom_call.1} parent=95 // pred_fallthru
          _
        %s810 = sand.u32 %s43, 1
        %s811 = scalar_lea.sflag [#allocation7], %s810
        %s812 = sand.u32 %s244, 1
        %s813 = scalar_lea.vmem [#allocation13], %s812
        // Predicated region
        $region113: #{tpu_custom_call.1} parent=95 // pred_check
          %p814 = pneg %p257
        $region114: #{tpu_custom_call.1} parent=95 // pred_check_branch
          %816 = sbr.rel (%p814) target = $region116
        $region115: #{tpu_custom_call.1} parent=95 // pred_region
          %818 = dma.done %s811, 16
        $region116: #{tpu_custom_call.1} parent=95 // pred_fallthru
          _
        %s819 = sand.u32 %s43, 1
        %s820 = scalar_lea.sflag [#allocation7], %s819
        %s821 = sand.u32 %s296, 1
        %s822 = scalar_lea.vmem [#allocation14], %s821
        // Predicated region
        $region117: #{tpu_custom_call.1} parent=95 // pred_check
          %p823 = pneg %p309
        $region118: #{tpu_custom_call.1} parent=95 // pred_check_branch
          %825 = sbr.rel (%p823) target = $region120
        $region119: #{tpu_custom_call.1} parent=95 // pred_region
          %827 = dma.done %s820, 16
        $region120: #{tpu_custom_call.1} parent=95 // pred_fallthru
          _
        %s828 = sand.u32 %s43, 1
        %s829 = scalar_lea.sflag [#allocation7], %s828
        %s830 = sand.u32 %s322, 1
        %s831 = scalar_lea.vmem [#allocation15], %s830
        // Predicated region
        $region121: #{tpu_custom_call.1} parent=95 // pred_check
          %p832 = pneg %p335
        $region122: #{tpu_custom_call.1} parent=95 // pred_check_branch
          %834 = sbr.rel (%p832) target = $region124
        $region123: #{tpu_custom_call.1} parent=95 // pred_region
          %836 = dma.done %s829, 16
        $region124: #{tpu_custom_call.1} parent=95 // pred_fallthru
          _
        %s837 = sand.u32 %s43, 1
        %s838 = scalar_lea.sflag [#allocation7], %s837
        %s839 = sand.u32 %s348, 1
        %s840 = scalar_lea.vmem [#allocation16], %s839
        // Predicated region
        $region125: #{tpu_custom_call.1} parent=95 // pred_check
          %p841 = pneg %p361
        $region126: #{tpu_custom_call.1} parent=95 // pred_check_branch
          %843 = sbr.rel (%p841) target = $region128
        $region127: #{tpu_custom_call.1} parent=95 // pred_region
          %845 = dma.done %s838, 16
        $region128: #{tpu_custom_call.1} parent=95 // pred_fallthru
          _
        %s846 = sand.u32 %s43, 1
        %s847 = scalar_lea.sflag [#allocation7], %s846
        %s848 = sand.u32 %s374, 1
        %s849 = scalar_lea.vmem [#allocation17], %s848
        // Predicated region
        $region129: #{tpu_custom_call.1} parent=95 // pred_check
          %p850 = pneg %p387
        $region130: #{tpu_custom_call.1} parent=95 // pred_check_branch
          %852 = sbr.rel (%p850) target = $region132
        $region131: #{tpu_custom_call.1} parent=95 // pred_region
          %854 = dma.done %s847, 16
        $region132: #{tpu_custom_call.1} parent=95 // pred_fallthru
          _
        %s855 = sand.u32 %s43, 1
        %s856 = scalar_lea.sflag [#allocation7], %s855
        %s857 = sand.u32 %s400, 1
        %s858 = scalar_lea.vmem [#allocation18], %s857
        // Predicated region
        $region133: #{tpu_custom_call.1} parent=95 // pred_check
          %p859 = pneg %p413
        $region134: #{tpu_custom_call.1} parent=95 // pred_check_branch
          %861 = sbr.rel (%p859) target = $region136
        $region135: #{tpu_custom_call.1} parent=95 // pred_region
          %863 = dma.done %s856, 16
        $region136: #{tpu_custom_call.1} parent=95 // pred_fallthru
          _
        // Predicated region
        $region137: #{tpu_custom_call.1} parent=95 // pred_check
          %p864 = pneg %p434
        $region138: #{tpu_custom_call.1} parent=95 // pred_check_branch
          %866 = sbr.rel (%p864) target = $region140
        $region139: #{tpu_custom_call.1} parent=95 // pred_region
          %868 = dma.done [#allocation10], 256
        $region140: #{tpu_custom_call.1} parent=95 // pred_fallthru
          _
        // Predicated region
        $region141: #{tpu_custom_call.1} parent=95 // pred_check
          %p869 = pneg %p455
        $region142: #{tpu_custom_call.1} parent=95 // pred_check_branch
          %871 = sbr.rel (%p869) target = $region144
        $region143: #{tpu_custom_call.1} parent=95 // pred_region
          %873 = dma.done [#allocation21], 16
        $region144: #{tpu_custom_call.1} parent=95 // pred_fallthru
          _
        // Predicated region
        $region145: #{tpu_custom_call.1} parent=95 // pred_check
          %p874 = pneg %p497
        $region146: #{tpu_custom_call.1} parent=95 // pred_check_branch
          %876 = sbr.rel (%p874) target = $region148
        $region147: #{tpu_custom_call.1} parent=95 // pred_region
          %878 = dma.done [#allocation21], 16
        $region148: #{tpu_custom_call.1} parent=95 // pred_fallthru
          _
        %p879 = pneg %p59
        %p880 = pneg %p56
        %p881 = pneg %p80
        %p882 = pneg %p77
        %p883 = pneg %p101
        %p884 = pneg %p98
        %p885 = scmp.lt.s32.totalorder %s43, 1
        %s886 = scalar_select %p885, %s43, 1
        %s887 = smul.addr %s886, 4
        %s888 = smul.addr %s887, 4
        %s889 = scalar_lea.vmem %s4, %s888
        %p890 = pneg %p127
        %p891 = pneg %p124
        %s892 = sand.u32 %s43, 1
        %s893 = scalar_lea.sflag [#allocation7], %s892
        %s894 = sand.u32 %s140, 1
        %s895 = scalar_lea.vmem [#allocation11], %s894
        %p896 = pneg %p153
        %p897 = pneg %p150
        %p898 = scmp.lt.s32.totalorder %s43, 1
        %s899 = scalar_select %p898, %s43, 1
        %s900 = smul.addr %s899, 4
        %s901 = smul.addr %s900, 4
        %s902 = scalar_lea.vmem %s6, %s901
        %p903 = pneg %p179
        %p904 = pneg %p176
        %s905 = sand.u32 %s43, 1
        %s906 = scalar_lea.sflag [#allocation7], %s905
        %s907 = sand.u32 %s192, 1
        %s908 = scalar_lea.vmem [#allocation12], %s907
        %p909 = pneg %p205
        %p910 = pneg %p202
        %p911 = scmp.lt.s32.totalorder %s43, 1
        %s912 = scalar_select %p911, %s43, 1
        %s913 = smul.addr %s912, 4
        %s914 = smul.addr %s913, 4
        %s915 = scalar_lea.vmem %s8, %s914
        %p916 = pneg %p231
        %p917 = pneg %p228
        %s918 = sand.u32 %s43, 1
        %s919 = scalar_lea.sflag [#allocation7], %s918
        %s920 = sand.u32 %s244, 1
        %s921 = scalar_lea.vmem [#allocation13], %s920
        %p922 = pneg %p257
        %p923 = pneg %p254
        %p924 = scmp.lt.s32.totalorder %s43, 1
        %s925 = scalar_select %p924, %s43, 1
        %s926 = smul.addr %s925, 8
        %s927 = smul.addr %s926, 4
        %s928 = scalar_lea.vmem %s10, %s927
        %p929 = pneg %p283
        %p930 = pneg %p280
        %s931 = sand.u32 %s43, 1
        %s932 = scalar_lea.sflag [#allocation7], %s931
        %s933 = sand.u32 %s296, 1
        %s934 = scalar_lea.vmem [#allocation14], %s933
        %p935 = pneg %p309
        %p936 = pneg %p306
        %s937 = sand.u32 %s43, 1
        %s938 = scalar_lea.sflag [#allocation7], %s937
        %s939 = sand.u32 %s322, 1
        %s940 = scalar_lea.vmem [#allocation15], %s939
        %p941 = pneg %p335
        %p942 = pneg %p332
        %s943 = sand.u32 %s43, 1
        %s944 = scalar_lea.sflag [#allocation7], %s943
        %s945 = sand.u32 %s348, 1
        %s946 = scalar_lea.vmem [#allocation16], %s945
        %p947 = pneg %p361
        %p948 = pneg %p358
        %s949 = sand.u32 %s43, 1
        %s950 = scalar_lea.sflag [#allocation7], %s949
        %s951 = sand.u32 %s374, 1
        %s952 = scalar_lea.vmem [#allocation17], %s951
        %p953 = pneg %p387
        %p954 = pneg %p384
        %s955 = sand.u32 %s43, 1
        %s956 = scalar_lea.sflag [#allocation7], %s955
        %s957 = sand.u32 %s400, 1
        %s958 = scalar_lea.vmem [#allocation18], %s957
        %p959 = pneg %p413
        %p960 = pneg %p410
        %p961 = pneg %p434
        %p962 = pneg %p431
        %p963 = pneg %p455
        %p964 = pneg %p452
        %p965 = pneg %p476
        %p966 = pneg %p473
        %p967 = pneg %p497
        %p968 = pneg %p494
        %p969 = pneg %p518
        %p970 = pneg %p515
        %p971 = scmp.lt.s32.totalorder %s43, 1
        %s972 = scalar_select %p971, %s43, 1
        %s973 = smul.addr %s972, 4
        %s974 = smul.addr %s973, 4
        %s975 = scalar_lea.vmem %s4, %s974
        %p976 = scmp.lt.s32.totalorder %s43, 1
        %s977 = scalar_select %p976, %s43, 1
        %s978 = smul.addr %s977, 4
        %s979 = smul.addr %s978, 4
        %s980 = scalar_lea.vmem %s6, %s979
        %p981 = scmp.lt.s32.totalorder %s43, 1
        %s982 = scalar_select %p981, %s43, 1
        %s983 = smul.addr %s982, 4
        %s984 = smul.addr %s983, 4
        %s985 = scalar_lea.vmem %s8, %s984
        %p986 = scmp.lt.s32.totalorder %s43, 1
        %s987 = scalar_select %p986, %s43, 1
        %s988 = smul.addr %s987, 8
        %s989 = smul.addr %s988, 4
        %s990 = scalar_lea.vmem %s10, %s989
        %p992 = scmp.eq.s32.totalorder %s43, 0
        // Predicated region
        $region149: #{tpu_custom_call.1} parent=95 // pred_check
          %p993 = pneg %p992
        $region150: #{tpu_custom_call.1} parent=95 // pred_check_branch
          %995 = sbr.rel (%p993) target = $region152
        $region151: #{tpu_custom_call.1} parent=95 // pred_region
          %v996 = vld [vmem:[#allocation6] sm:$0xff]
          %v997 = vld [vmem:[#allocation6 + $0x8] sm:$0xff]
          %v998 = vld [vmem:[%s2] sm:$0x1]
          %v999 = vld [vmem:[#allocation9] sm:$0x1]
          %vm1000 = vcmask 261120
          %v1001 = vsel %vm1000, %v996, 0.0
          %1002 = vadd.xlane.f32.xlu0 %v1001
          %v1003 = vpop.xlane.xlu0 %1002
          %v1004 = vsel %vm1000, %v997, 0.0
          %1005 = vadd.xlane.f32.xlu0 %v1004
          %v1006 = vpop.xlane.xlu0 %1005
          %v1007 = vrcp.pop 32.0
          %v1008 = vmul.f32 32.0, %v1007
          %v1009 = vsub.f32 1.0, %v1008
          %v1010 = vmul.f32 %v1007, %v1009
          %v1011 = vadd.f32 %v1007, %v1010
          %vm1012 = vweird.f32 %v1007
          %v1013 = vsel %vm1012, %v1007, %v1011
          %v1014 = vmul.f32 %v1003, %v1013
          %v1015 = vmul.f32 %v1006, %v1013
          %v1016 = vsub.f32 %v996, %v1014
          %v1017 = vsub.f32 %v997, %v1015
          %v1018 = vmul.f32 %v1016, %v1016
          %v1019 = vmul.f32 %v1017, %v1017
          %v1020 = vsel %vm1000, %v1018, 0.0
          %1021 = vadd.xlane.f32.xlu0 %v1020
          %v1022 = vpop.xlane.xlu0 %1021
          %v1023 = vsel %vm1000, %v1019, 0.0
          %1024 = vadd.xlane.f32.xlu0 %v1023
          %v1025 = vpop.xlane.xlu0 %1024
          %v1026 = vmul.f32 %v1022, %v1013
          %v1027 = vmul.f32 %v1025, %v1013
          %v1028 = vadd.f32 %v1026, 1e-12
          %v1029 = vadd.f32 %v1027, 1e-12
          %v1030 = vrsqrt.pop %v1028
          %v1031 = vmul.f32 %v1030, %v1028
          %v1032 = vmul.f32 %v1031, %v1030
          %v1033 = vmul.f32 0.5, %v1032
          %v1034 = vsub.f32 1.5, %v1033
          %v1035 = vmul.f32 %v1030, %v1034
          %vm1036 = vweird.f32 %v1028
          %vm1037 = vweird.f32 %v1030
          %vm1038 = vmor %vm1036, %vm1037
          %v1039 = vsel %vm1038, %v1030, %v1035
          %v1040 = vrsqrt.pop %v1029
          %v1041 = vmul.f32 %v1040, %v1029
          %v1042 = vmul.f32 %v1041, %v1040
          %v1043 = vmul.f32 0.5, %v1042
          %v1044 = vsub.f32 1.5, %v1043
          %v1045 = vmul.f32 %v1040, %v1044
          %vm1046 = vweird.f32 %v1029
          %vm1047 = vweird.f32 %v1040
          %vm1048 = vmor %vm1046, %vm1047
          %v1049 = vsel %vm1048, %v1040, %v1045
          %v1050 = vmul.f32 %v1016, %v1039
          %v1051 = vmul.f32 %v1017, %v1049
          %v1053 = vperm.slane %v998, 0
          %v1055 = vmul.f32 %v1050, %v1053
          %v1056 = vmul.f32 %v1051, %v1053
          %v1058 = vperm.slane %v999, 0
          %v1060 = vadd.f32 %v1055, %v1058
          %v1061 = vadd.f32 %v1056, %v1058
          %1062 = vst.msk [vmem:[#allocation2] sm:$0xff] %vm1000, %v1060
          %1063 = vst.msk [vmem:[#allocation2 + $0x8] sm:$0xff] %vm1000, %v1061
        $region152: #{tpu_custom_call.1} parent=95 // pred_fallthru
          _
        %v1064 = vlaneseq
        %v1065 = vand.u32 %v1064, 127
        %s1066 = sld [smem:[#allocation5]]
        %v1067 = vstv %s1066
        %vm1068 = vcmp.lt.s32.totalorder %v1065, %v1067
        %v1069 = vsel %vm1068, 0.0, -1e+09
        %s1070 = sld [smem:[#allocation5 + $0x1]]
        %v1071 = vstv %s1070
        %vm1072 = vcmp.lt.s32.totalorder %v1065, %v1071
        %v1073 = vsel %vm1072, 0.0, -1e+09
        %v1074 = vld [vmem:[#allocation2] sm:$0xff]
        %v1075 = vld [vmem:[#allocation2 + $0x8] sm:$0xff]
        %v1076 = vld [vmem:[%s975] sm:$0xf]
        %v1077 = vld [vmem:[%s975 + $0x4] sm:$0xf]
        %v1078 = vld [vmem:[%s975 + $0x8] sm:$0xf]
        %v1079 = vld [vmem:[%s975 + $0xc] sm:$0xf]
        %v1080 = vpack.c.bf16 %v1075, %v1074
        %v1081 = vld [vmem:[%s795] sm:$0x1]
        %v1083 = vperm.slane %v1081, 0
        %v1089 = vunpack.c.l.b16 %v1076
        %v1090 = vunpack.c.l.b16 %v1077
        %v1091 = vunpack.c.l.b16 %v1078
        %v1092 = vunpack.c.l.b16 %v1079
        %v1093 = vpack.c.b16 %v1090, %v1089
        %v1094 = vpack.c.b16 %v1092, %v1091
        %vm1097 = vcmask 261120
        %v1099 = vsel %vm1097, %v1080, 0
        %1101 = vmatpush.bf16.msra.mxu0 0
        %1102 = vmatpush.bf16.msra.mxu0 0
        %1103 = vmatpush.bf16.msra.mxu0 0
        %1104 = vmatpush.bf16.msra.mxu0 0
        %1105 = vmatpush.bf16.msra.mxu0 0
        %1106 = vmatpush.bf16.msra.mxu0 0
        %1107 = vmatpush.bf16.msra.mxu0 %v1094
        %1108 = vmatpush.bf16.msra.mxu0 %v1093
        %1109 = vmatmul.bf16.gmra.mxu0 %v1099
        %v1110 = vpop.f32.mrf.mxu0
        %v1111 = vadd.f32 %v1083, %v1110
        %v1112 = vpop.f32.mrf.mxu0
        %v1113 = vadd.f32 %v1083, %v1112
        %1114 = vdwg.mxu0
        %v1115 = vmul.f32 %v1111, 0.35355338
        %v1116 = vmul.f32 %v1113, 0.35355338
        %v1117 = vpack.c.bf16 %v1115, %v1115
        %v1118 = vpack.c.bf16 %v1116, %v1116
        %v1119 = vpack.c.bf16 %v1111, %v1111
        %v1120 = vpack.c.bf16 %v1113, %v1113
        %v1121 = vperm.slane %v1069, 0
        %v1122 = vperm.slane %v1073, 0
        %v1124 = vunpack.c.l.b16 %v1119
        %v1125 = vpack.c.b16 %v1124, %v1124
        %1126 = vrot.lane.b32.xlu0 %v1125, 96
        %v1127 = vpop.permute.xlu0 %1126
        %vm1128 = vcmask 64512
        %v1130 = vsel %vm1128, %v1117, 0
        %v1133 = vsel %vm1128, %v1127, 0
        %1135 = vmatpush.bf16.xpose.msra.mxu0 0
        %1136 = vmatpush.bf16.xpose.msra.mxu0 0
        %1137 = vmatpush.bf16.xpose.msra.mxu0 0
        %1138 = vmatpush.bf16.xpose.msra.mxu0 0
        %1139 = vmatpush.bf16.xpose.msra.mxu0 0
        %1140 = vmatpush.bf16.xpose.msra.mxu0 0
        %1141 = vmatpush.bf16.xpose.msra.mxu0 0
        %1142 = vmatpush.bf16.xpose.msra.mxu0 %v1133
        %1143 = vmatmul.bf16.gmra.mxu0 %v1130
        %v1144 = vpop.f32.mrf.mxu0
        %v1145 = vadd.f32 %v1121, %v1144
        %v1146 = vpop.f32.mrf.mxu0
        %1147 = vdwg.mxu0
        %v1149 = vunpack.c.l.b16 %v1120
        %v1150 = vpack.c.b16 %v1149, %v1149
        %1151 = vrot.lane.b32.xlu0 %v1150, 96
        %v1152 = vpop.permute.xlu0 %1151
        %v1154 = vsel %vm1128, %v1118, 0
        %v1157 = vsel %vm1128, %v1152, 0
        %1159 = vmatpush.bf16.xpose.msra.mxu0 0
        %1160 = vmatpush.bf16.xpose.msra.mxu0 0
        %1161 = vmatpush.bf16.xpose.msra.mxu0 0
        %1162 = vmatpush.bf16.xpose.msra.mxu0 0
        %1163 = vmatpush.bf16.xpose.msra.mxu0 0
        %1164 = vmatpush.bf16.xpose.msra.mxu0 0
        %1165 = vmatpush.bf16.xpose.msra.mxu0 0
        %1166 = vmatpush.bf16.xpose.msra.mxu0 %v1157
        %1167 = vmatmul.bf16.gmra.mxu0 %v1154
        %v1168 = vpop.f32.mrf.mxu0
        %v1169 = vadd.f32 %v1122, %v1168
        %v1170 = vpop.f32.mrf.mxu0
        %1171 = vdwg.mxu0
        %v1172 = vsel %vm1128, %v1145, -inf
        %1173 = vmax.xlane.f32.xlu0 %v1172
        %v1174 = vpop.xlane.xlu0 %1173
        %v1175 = vsel %vm1128, %v1169, -inf
        %1176 = vmax.xlane.f32.xlu0 %v1175
        %v1177 = vpop.xlane.xlu0 %1176
        %v1178 = vsub.f32 %v1145, %v1174
        %v1179 = vsub.f32 %v1169, %v1177
        %v1180 = vmul.f32 %v1178, 1.442695
        %v1181 = vpow.pop %v1180
        %v1182 = vmul.f32 %v1179, 1.442695
        %v1183 = vpow.pop %v1182
        %v1184 = vsel %vm1128, %v1181, 0.0
        %1185 = vadd.xlane.f32.xlu0 %v1184
        %v1186 = vpop.xlane.xlu0 %1185
        %v1187 = vsel %vm1128, %v1183, 0.0
        %1188 = vadd.xlane.f32.xlu0 %v1187
        %v1189 = vpop.xlane.xlu0 %1188
        %v1190 = vrcp.pop %v1186
        %v1191 = vrcp.pop %v1189
        %v1192 = vmul.f32 %v1181, %v1190
        %v1193 = vmul.f32 %v1183, %v1191
        %v1194 = vpack.c.bf16 %v1192, %v1192
        %v1195 = vpack.c.bf16 %v1193, %v1193
        %1196 = vrot.lane.b32.xlu0 %v1125, 64
        %v1197 = vpop.permute.xlu0 %1196
        %v1199 = vsel %vm1128, %v1194, 0
        %vm1201 = vcmask 1043456
        %v1203 = vsel %vm1201, %v1197, 0
        %1205 = vmatpush.bf16.msra.mxu0 0
        %1206 = vmatpush.bf16.msra.mxu0 0
        %1207 = vmatpush.bf16.msra.mxu0 0
        %1208 = vmatpush.bf16.msra.mxu0 0
        %1209 = vmatpush.bf16.msra.mxu0 0
        %1210 = vmatpush.bf16.msra.mxu0 0
        %1211 = vmatpush.bf16.msra.mxu0 0
        %1212 = vmatpush.bf16.msra.mxu0 %v1203
        %1213 = vmatmul.bf16.gmra.mxu0 %v1199
        %v1214 = vpop.f32.mrf.mxu0
        %v1215 = vadd.f32 0.0, %v1214
        %v1216 = vpop.f32.mrf.mxu0
        %1217 = vdwg.mxu0
        %1218 = vrot.lane.b32.xlu0 %v1150, 64
        %v1219 = vpop.permute.xlu0 %1218
        %v1221 = vsel %vm1128, %v1195, 0
        %v1224 = vsel %vm1201, %v1219, 0
        %1226 = vmatpush.bf16.msra.mxu0 0
        %1227 = vmatpush.bf16.msra.mxu0 0
        %1228 = vmatpush.bf16.msra.mxu0 0
        %1229 = vmatpush.bf16.msra.mxu0 0
        %1230 = vmatpush.bf16.msra.mxu0 0
        %1231 = vmatpush.bf16.msra.mxu0 0
        %1232 = vmatpush.bf16.msra.mxu0 0
        %1233 = vmatpush.bf16.msra.mxu0 %v1224
        %1234 = vmatmul.bf16.gmra.mxu0 %v1221
        %v1235 = vpop.f32.mrf.mxu0
        %v1236 = vadd.f32 0.0, %v1235
        %v1237 = vpop.f32.mrf.mxu0
        %1238 = vdwg.mxu0
        %1239 = vst.msk [vmem:[#allocation3] sm:$0xff] %vm1128, %v1215
        %1240 = vst.msk [vmem:[#allocation3 + $0x8] sm:$0xff] %vm1128, %v1236
        %v1242 = vunpack.c.l.b16 %v1117
        %v1243 = vpack.c.b16 %v1242, %v1242
        %1244 = vrot.lane.b32.xlu0 %v1243, 120
        %v1245 = vpop.permute.xlu0 %1244
        %1246 = vrot.lane.b32.xlu0 %v1125, 88
        %v1247 = vpop.permute.xlu0 %1246
        %v1249 = vsel %vm1128, %v1245, 0
        %v1252 = vsel %vm1128, %v1247, 0
        %1254 = vmatpush.bf16.xpose.msra.mxu0 0
        %1255 = vmatpush.bf16.xpose.msra.mxu0 0
        %1256 = vmatpush.bf16.xpose.msra.mxu0 0
        %1257 = vmatpush.bf16.xpose.msra.mxu0 0
        %1258 = vmatpush.bf16.xpose.msra.mxu0 0
        %1259 = vmatpush.bf16.xpose.msra.mxu0 0
        %1260 = vmatpush.bf16.xpose.msra.mxu0 0
        %1261 = vmatpush.bf16.xpose.msra.mxu0 %v1252
        %1262 = vmatmul.bf16.gmra.mxu0 %v1249
        %v1263 = vpop.f32.mrf.mxu0
        %v1264 = vadd.f32 %v1121, %v1263
        %v1265 = vpop.f32.mrf.mxu0
        %1266 = vdwg.mxu0
        %v1268 = vunpack.c.l.b16 %v1118
        %v1269 = vpack.c.b16 %v1268, %v1268
        %1270 = vrot.lane.b32.xlu0 %v1269, 120
        %v1271 = vpop.permute.xlu0 %1270
        %1272 = vrot.lane.b32.xlu0 %v1150, 88
        %v1273 = vpop.permute.xlu0 %1272
        %v1275 = vsel %vm1128, %v1271, 0
        %v1278 = vsel %vm1128, %v1273, 0
        %1280 = vmatpush.bf16.xpose.msra.mxu0 0
        %1281 = vmatpush.bf16.xpose.msra.mxu0 0
        %1282 = vmatpush.bf16.xpose.msra.mxu0 0
        %1283 = vmatpush.bf16.xpose.msra.mxu0 0
        %1284 = vmatpush.bf16.xpose.msra.mxu0 0
        %1285 = vmatpush.bf16.xpose.msra.mxu0 0
        %1286 = vmatpush.bf16.xpose.msra.mxu0 0
        %1287 = vmatpush.bf16.xpose.msra.mxu0 %v1278
        %1288 = vmatmul.bf16.gmra.mxu0 %v1275
        %v1289 = vpop.f32.mrf.mxu0
        %v1290 = vadd.f32 %v1122, %v1289
        %v1291 = vpop.f32.mrf.mxu0
        %1292 = vdwg.mxu0
        %v1293 = vsel %vm1128, %v1264, -inf
        %1294 = vmax.xlane.f32.xlu0 %v1293
        %v1295 = vpop.xlane.xlu0 %1294
        %v1296 = vsel %vm1128, %v1290, -inf
        %1297 = vmax.xlane.f32.xlu0 %v1296
        %v1298 = vpop.xlane.xlu0 %1297
        %v1299 = vsub.f32 %v1264, %v1295
        %v1300 = vsub.f32 %v1290, %v1298
        %v1301 = vmul.f32 %v1299, 1.442695
        %v1302 = vpow.pop %v1301
        %v1303 = vmul.f32 %v1300, 1.442695
        %v1304 = vpow.pop %v1303
        %v1305 = vsel %vm1128, %v1302, 0.0
        %1306 = vadd.xlane.f32.xlu0 %v1305
        %v1307 = vpop.xlane.xlu0 %1306
        %v1308 = vsel %vm1128, %v1304, 0.0
        %1309 = vadd.xlane.f32.xlu0 %v1308
        %v1310 = vpop.xlane.xlu0 %1309
        %v1311 = vrcp.pop %v1307
        %v1312 = vrcp.pop %v1310
        %v1313 = vmul.f32 %v1302, %v1311
        %v1314 = vmul.f32 %v1304, %v1312
        %v1315 = vpack.c.bf16 %v1313, %v1313
        %v1316 = vpack.c.bf16 %v1314, %v1314
        %1317 = vrot.lane.b32.xlu0 %v1125, 56
        %v1318 = vpop.permute.xlu0 %1317
        %v1320 = vsel %vm1128, %v1315, 0
        %v1323 = vsel %vm1201, %v1318, 0
        %1325 = vmatpush.bf16.msra.mxu0 0
        %1326 = vmatpush.bf16.msra.mxu0 0
        %1327 = vmatpush.bf16.msra.mxu0 0
        %1328 = vmatpush.bf16.msra.mxu0 0
        %1329 = vmatpush.bf16.msra.mxu0 0
        %1330 = vmatpush.bf16.msra.mxu0 0
        %1331 = vmatpush.bf16.msra.mxu0 0
        %1332 = vmatpush.bf16.msra.mxu0 %v1323
        %1333 = vmatmul.bf16.gmra.mxu0 %v1320
        %v1334 = vpop.f32.mrf.mxu0
        %v1335 = vadd.f32 0.0, %v1334
        %v1336 = vpop.f32.mrf.mxu0
        %1337 = vdwg.mxu0
        %1338 = vrot.lane.b32.xlu0 %v1150, 56
        %v1339 = vpop.permute.xlu0 %1338
        %v1341 = vsel %vm1128, %v1316, 0
        %v1344 = vsel %vm1201, %v1339, 0
        %1346 = vmatpush.bf16.msra.mxu0 0
        %1347 = vmatpush.bf16.msra.mxu0 0
        %1348 = vmatpush.bf16.msra.mxu0 0
        %1349 = vmatpush.bf16.msra.mxu0 0
        %1350 = vmatpush.bf16.msra.mxu0 0
        %1351 = vmatpush.bf16.msra.mxu0 0
        %1352 = vmatpush.bf16.msra.mxu0 0
        %1353 = vmatpush.bf16.msra.mxu0 %v1344
        %1354 = vmatmul.bf16.gmra.mxu0 %v1341
        %v1355 = vpop.f32.mrf.mxu0
        %v1356 = vadd.f32 0.0, %v1355
        %v1357 = vpop.f32.mrf.mxu0
        %1358 = vdwg.mxu0
        %1361 = vrot.lane.b32.xlu0 %v1335, 8
        %v1362 = vpop.permute.xlu0 %1361
        %1363 = vrot.lane.b32.xlu0 %v1356, 8
        %v1364 = vpop.permute.xlu0 %1363
        %vm1367 = vcmask 130112
        %1368 = vst.msk [vmem:[#allocation3] sm:$0xff] %vm1367, %v1362
        %1369 = vst.msk [vmem:[#allocation3 + $0x8] sm:$0xff] %vm1367, %v1364
        %1370 = vrot.lane.b32.xlu0 %v1243, 112
        %v1371 = vpop.permute.xlu0 %1370
        %1372 = vrot.lane.b32.xlu0 %v1125, 80
        %v1373 = vpop.permute.xlu0 %1372
        %v1375 = vsel %vm1128, %v1371, 0
        %v1378 = vsel %vm1128, %v1373, 0
        %1380 = vmatpush.bf16.xpose.msra.mxu0 0
        %1381 = vmatpush.bf16.xpose.msra.mxu0 0
        %1382 = vmatpush.bf16.xpose.msra.mxu0 0
        %1383 = vmatpush.bf16.xpose.msra.mxu0 0
        %1384 = vmatpush.bf16.xpose.msra.mxu0 0
        %1385 = vmatpush.bf16.xpose.msra.mxu0 0
        %1386 = vmatpush.bf16.xpose.msra.mxu0 0
        %1387 = vmatpush.bf16.xpose.msra.mxu0 %v1378
        %1388 = vmatmul.bf16.gmra.mxu0 %v1375
        %v1389 = vpop.f32.mrf.mxu0
        %v1390 = vadd.f32 %v1121, %v1389
        %v1391 = vpop.f32.mrf.mxu0
        %1392 = vdwg.mxu0
        %1393 = vrot.lane.b32.xlu0 %v1269, 112
        %v1394 = vpop.permute.xlu0 %1393
        %1395 = vrot.lane.b32.xlu0 %v1150, 80
        %v1396 = vpop.permute.xlu0 %1395
        %v1398 = vsel %vm1128, %v1394, 0
        %v1401 = vsel %vm1128, %v1396, 0
        %1403 = vmatpush.bf16.xpose.msra.mxu0 0
        %1404 = vmatpush.bf16.xpose.msra.mxu0 0
        %1405 = vmatpush.bf16.xpose.msra.mxu0 0
        %1406 = vmatpush.bf16.xpose.msra.mxu0 0
        %1407 = vmatpush.bf16.xpose.msra.mxu0 0
        %1408 = vmatpush.bf16.xpose.msra.mxu0 0
        %1409 = vmatpush.bf16.xpose.msra.mxu0 0
        %1410 = vmatpush.bf16.xpose.msra.mxu0 %v1401
        %1411 = vmatmul.bf16.gmra.mxu0 %v1398
        %v1412 = vpop.f32.mrf.mxu0
        %v1413 = vadd.f32 %v1122, %v1412
        %v1414 = vpop.f32.mrf.mxu0
        %1415 = vdwg.mxu0
        %v1416 = vsel %vm1128, %v1390, -inf
        %1417 = vmax.xlane.f32.xlu0 %v1416
        %v1418 = vpop.xlane.xlu0 %1417
        %v1419 = vsel %vm1128, %v1413, -inf
        %1420 = vmax.xlane.f32.xlu0 %v1419
        %v1421 = vpop.xlane.xlu0 %1420
        %v1422 = vsub.f32 %v1390, %v1418
        %v1423 = vsub.f32 %v1413, %v1421
        %v1424 = vmul.f32 %v1422, 1.442695
        %v1425 = vpow.pop %v1424
        %v1426 = vmul.f32 %v1423, 1.442695
        %v1427 = vpow.pop %v1426
        %v1428 = vsel %vm1128, %v1425, 0.0
        %1429 = vadd.xlane.f32.xlu0 %v1428
        %v1430 = vpop.xlane.xlu0 %1429
        %v1431 = vsel %vm1128, %v1427, 0.0
        %1432 = vadd.xlane.f32.xlu0 %v1431
        %v1433 = vpop.xlane.xlu0 %1432
        %v1434 = vrcp.pop %v1430
        %v1435 = vrcp.pop %v1433
        %v1436 = vmul.f32 %v1425, %v1434
        %v1437 = vmul.f32 %v1427, %v1435
        %v1438 = vpack.c.bf16 %v1436, %v1436
        %v1439 = vpack.c.bf16 %v1437, %v1437
        %1440 = vrot.lane.b32.xlu0 %v1125, 48
        %v1441 = vpop.permute.xlu0 %1440
        %v1443 = vsel %vm1128, %v1438, 0
        %v1446 = vsel %vm1201, %v1441, 0
        %1448 = vmatpush.bf16.msra.mxu0 0
        %1449 = vmatpush.bf16.msra.mxu0 0
        %1450 = vmatpush.bf16.msra.mxu0 0
        %1451 = vmatpush.bf16.msra.mxu0 0
        %1452 = vmatpush.bf16.msra.mxu0 0
        %1453 = vmatpush.bf16.msra.mxu0 0
        %1454 = vmatpush.bf16.msra.mxu0 0
        %1455 = vmatpush.bf16.msra.mxu0 %v1446
        %1456 = vmatmul.bf16.gmra.mxu0 %v1443
        %v1457 = vpop.f32.mrf.mxu0
        %v1458 = vadd.f32 0.0, %v1457
        %v1459 = vpop.f32.mrf.mxu0
        %1460 = vdwg.mxu0
        %1461 = vrot.lane.b32.xlu0 %v1150, 48
        %v1462 = vpop.permute.xlu0 %1461
        %v1464 = vsel %vm1128, %v1439, 0
        %v1467 = vsel %vm1201, %v1462, 0
        %1469 = vmatpush.bf16.msra.mxu0 0
        %1470 = vmatpush.bf16.msra.mxu0 0
        %1471 = vmatpush.bf16.msra.mxu0 0
        %1472 = vmatpush.bf16.msra.mxu0 0
        %1473 = vmatpush.bf16.msra.mxu0 0
        %1474 = vmatpush.bf16.msra.mxu0 0
        %1475 = vmatpush.bf16.msra.mxu0 0
        %1476 = vmatpush.bf16.msra.mxu0 %v1467
        %1477 = vmatmul.bf16.gmra.mxu0 %v1464
        %v1478 = vpop.f32.mrf.mxu0
        %v1479 = vadd.f32 0.0, %v1478
        %v1480 = vpop.f32.mrf.mxu0
        %1481 = vdwg.mxu0
        %1484 = vrot.lane.b32.xlu0 %v1458, 16
        %v1485 = vpop.permute.xlu0 %1484
        %1486 = vrot.lane.b32.xlu0 %v1479, 16
        %v1487 = vpop.permute.xlu0 %1486
        %vm1490 = vcmask 195712
        %1491 = vst.msk [vmem:[#allocation3] sm:$0xff] %vm1490, %v1485
        %1492 = vst.msk [vmem:[#allocation3 + $0x8] sm:$0xff] %vm1490, %v1487
        %1493 = vrot.lane.b32.xlu0 %v1243, 104
        %v1494 = vpop.permute.xlu0 %1493
        %1495 = vrot.lane.b32.xlu0 %v1125, 72
        %v1496 = vpop.permute.xlu0 %1495
        %v1498 = vsel %vm1128, %v1494, 0
        %v1501 = vsel %vm1128, %v1496, 0
        %1503 = vmatpush.bf16.xpose.msra.mxu0 0
        %1504 = vmatpush.bf16.xpose.msra.mxu0 0
        %1505 = vmatpush.bf16.xpose.msra.mxu0 0
        %1506 = vmatpush.bf16.xpose.msra.mxu0 0
        %1507 = vmatpush.bf16.xpose.msra.mxu0 0
        %1508 = vmatpush.bf16.xpose.msra.mxu0 0
        %1509 = vmatpush.bf16.xpose.msra.mxu0 0
        %1510 = vmatpush.bf16.xpose.msra.mxu0 %v1501
        %1511 = vmatmul.bf16.gmra.mxu0 %v1498
        %v1512 = vpop.f32.mrf.mxu0
        %v1513 = vadd.f32 %v1121, %v1512
        %v1514 = vpop.f32.mrf.mxu0
        %1515 = vdwg.mxu0
        %1516 = vrot.lane.b32.xlu0 %v1269, 104
        %v1517 = vpop.permute.xlu0 %1516
        %1518 = vrot.lane.b32.xlu0 %v1150, 72
        %v1519 = vpop.permute.xlu0 %1518
        %v1521 = vsel %vm1128, %v1517, 0
        %v1524 = vsel %vm1128, %v1519, 0
        %1526 = vmatpush.bf16.xpose.msra.mxu0 0
        %1527 = vmatpush.bf16.xpose.msra.mxu0 0
        %1528 = vmatpush.bf16.xpose.msra.mxu0 0
        %1529 = vmatpush.bf16.xpose.msra.mxu0 0
        %1530 = vmatpush.bf16.xpose.msra.mxu0 0
        %1531 = vmatpush.bf16.xpose.msra.mxu0 0
        %1532 = vmatpush.bf16.xpose.msra.mxu0 0
        %1533 = vmatpush.bf16.xpose.msra.mxu0 %v1524
        %1534 = vmatmul.bf16.gmra.mxu0 %v1521
        %v1535 = vpop.f32.mrf.mxu0
        %v1536 = vadd.f32 %v1122, %v1535
        %v1537 = vpop.f32.mrf.mxu0
        %1538 = vdwg.mxu0
        %v1539 = vsel %vm1128, %v1513, -inf
        %1540 = vmax.xlane.f32.xlu0 %v1539
        %v1541 = vpop.xlane.xlu0 %1540
        %v1542 = vsel %vm1128, %v1536, -inf
        %1543 = vmax.xlane.f32.xlu0 %v1542
        %v1544 = vpop.xlane.xlu0 %1543
        %v1545 = vsub.f32 %v1513, %v1541
        %v1546 = vsub.f32 %v1536, %v1544
        %v1547 = vmul.f32 %v1545, 1.442695
        %v1548 = vpow.pop %v1547
        %v1549 = vmul.f32 %v1546, 1.442695
        %v1550 = vpow.pop %v1549
        %v1551 = vsel %vm1128, %v1548, 0.0
        %1552 = vadd.xlane.f32.xlu0 %v1551
        %v1553 = vpop.xlane.xlu0 %1552
        %v1554 = vsel %vm1128, %v1550, 0.0
        %1555 = vadd.xlane.f32.xlu0 %v1554
        %v1556 = vpop.xlane.xlu0 %1555
        %v1557 = vrcp.pop %v1553
        %v1558 = vrcp.pop %v1556
        %v1559 = vmul.f32 %v1548, %v1557
        %v1560 = vmul.f32 %v1550, %v1558
        %v1561 = vpack.c.bf16 %v1559, %v1559
        %v1562 = vpack.c.bf16 %v1560, %v1560
        %1563 = vrot.lane.b32.xlu0 %v1125, 40
        %v1564 = vpop.permute.xlu0 %1563
        %v1566 = vsel %vm1128, %v1561, 0
        %v1569 = vsel %vm1201, %v1564, 0
        %1571 = vmatpush.bf16.msra.mxu0 0
        %1572 = vmatpush.bf16.msra.mxu0 0
        %1573 = vmatpush.bf16.msra.mxu0 0
        %1574 = vmatpush.bf16.msra.mxu0 0
        %1575 = vmatpush.bf16.msra.mxu0 0
        %1576 = vmatpush.bf16.msra.mxu0 0
        %1577 = vmatpush.bf16.msra.mxu0 0
        %1578 = vmatpush.bf16.msra.mxu0 %v1569
        %1579 = vmatmul.bf16.gmra.mxu0 %v1566
        %v1580 = vpop.f32.mrf.mxu0
        %v1581 = vadd.f32 0.0, %v1580
        %v1582 = vpop.f32.mrf.mxu0
        %1583 = vdwg.mxu0
        %1584 = vrot.lane.b32.xlu0 %v1150, 40
        %v1585 = vpop.permute.xlu0 %1584
        %v1587 = vsel %vm1128, %v1562, 0
        %v1590 = vsel %vm1201, %v1585, 0
        %1592 = vmatpush.bf16.msra.mxu0 0
        %1593 = vmatpush.bf16.msra.mxu0 0
        %1594 = vmatpush.bf16.msra.mxu0 0
        %1595 = vmatpush.bf16.msra.mxu0 0
        %1596 = vmatpush.bf16.msra.mxu0 0
        %1597 = vmatpush.bf16.msra.mxu0 0
        %1598 = vmatpush.bf16.msra.mxu0 0
        %1599 = vmatpush.bf16.msra.mxu0 %v1590
        %1600 = vmatmul.bf16.gmra.mxu0 %v1587
        %v1601 = vpop.f32.mrf.mxu0
        %v1602 = vadd.f32 0.0, %v1601
        %v1603 = vpop.f32.mrf.mxu0
        %1604 = vdwg.mxu0
        %1607 = vrot.lane.b32.xlu0 %v1581, 24
        %v1608 = vpop.permute.xlu0 %1607
        %1609 = vrot.lane.b32.xlu0 %v1602, 24
        %v1610 = vpop.permute.xlu0 %1609
        %vm1613 = vcmask 261312
        %1614 = vst.msk [vmem:[#allocation3] sm:$0xff] %vm1613, %v1608
        %1615 = vst.msk [vmem:[#allocation3 + $0x8] sm:$0xff] %vm1613, %v1610
        %v1616 = vld [vmem:[#allocation3] sm:$0xff]
        %v1617 = vld [vmem:[#allocation3 + $0x8] sm:$0xff]
        %v1618 = vld [vmem:[%s980] sm:$0xf]
        %v1619 = vld [vmem:[%s980 + $0x4] sm:$0xf]
        %v1620 = vld [vmem:[%s980 + $0x8] sm:$0xf]
        %v1621 = vld [vmem:[%s980 + $0xc] sm:$0xf]
        %v1622 = vpack.c.bf16 %v1617, %v1616
        %v1623 = vld [vmem:[%s804] sm:$0x1]
        %v1625 = vperm.slane %v1623, 0
        %v1631 = vunpack.c.l.b16 %v1618
        %v1632 = vunpack.c.l.b16 %v1619
        %v1633 = vunpack.c.l.b16 %v1620
        %v1634 = vunpack.c.l.b16 %v1621
        %v1635 = vpack.c.b16 %v1632, %v1631
        %v1636 = vpack.c.b16 %v1634, %v1633
        %v1640 = vsel %vm1097, %v1622, 0
        %1642 = vmatpush.bf16.msra.mxu0 0
        %1643 = vmatpush.bf16.msra.mxu0 0
        %1644 = vmatpush.bf16.msra.mxu0 0
        %1645 = vmatpush.bf16.msra.mxu0 0
        %1646 = vmatpush.bf16.msra.mxu0 0
        %1647 = vmatpush.bf16.msra.mxu0 0
        %1648 = vmatpush.bf16.msra.mxu0 %v1636
        %1649 = vmatpush.bf16.msra.mxu0 %v1635
        %1650 = vmatmul.bf16.gmra.mxu0 %v1640
        %v1651 = vpop.f32.mrf.mxu0
        %v1652 = vadd.f32 %v1625, %v1651
        %v1653 = vpop.f32.mrf.mxu0
        %v1654 = vadd.f32 %v1625, %v1653
        %1655 = vdwg.mxu0
        %v1656 = vadd.f32 %v1652, %v1074
        %v1657 = vadd.f32 %v1654, %v1075
        %v1658 = vld [vmem:[%s831] sm:$0x1]
        %v1659 = vld [vmem:[%s840] sm:$0x1]
        %v1660 = vsel %vm1097, %v1656, 0.0
        %1661 = vadd.xlane.f32.xlu0 %v1660
        %v1662 = vpop.xlane.xlu0 %1661
        %v1663 = vsel %vm1097, %v1657, 0.0
        %1664 = vadd.xlane.f32.xlu0 %v1663
        %v1665 = vpop.xlane.xlu0 %1664
        %v1666 = vrcp.pop 32.0
        %v1667 = vmul.f32 32.0, %v1666
        %v1668 = vsub.f32 1.0, %v1667
        %v1669 = vmul.f32 %v1666, %v1668
        %v1670 = vadd.f32 %v1666, %v1669
        %vm1671 = vweird.f32 %v1666
        %v1672 = vsel %vm1671, %v1666, %v1670
        %v1673 = vmul.f32 %v1662, %v1672
        %v1674 = vmul.f32 %v1665, %v1672
        %v1675 = vsub.f32 %v1656, %v1673
        %v1676 = vsub.f32 %v1657, %v1674
        %v1677 = vmul.f32 %v1675, %v1675
        %v1678 = vmul.f32 %v1676, %v1676
        %v1679 = vsel %vm1097, %v1677, 0.0
        %1680 = vadd.xlane.f32.xlu0 %v1679
        %v1681 = vpop.xlane.xlu0 %1680
        %v1682 = vsel %vm1097, %v1678, 0.0
        %1683 = vadd.xlane.f32.xlu0 %v1682
        %v1684 = vpop.xlane.xlu0 %1683
        %v1685 = vmul.f32 %v1681, %v1672
        %v1686 = vmul.f32 %v1684, %v1672
        %v1687 = vadd.f32 %v1685, 1e-12
        %v1688 = vadd.f32 %v1686, 1e-12
        %v1689 = vrsqrt.pop %v1687
        %v1690 = vmul.f32 %v1689, %v1687
        %v1691 = vmul.f32 %v1690, %v1689
        %v1692 = vmul.f32 0.5, %v1691
        %v1693 = vsub.f32 1.5, %v1692
        %v1694 = vmul.f32 %v1689, %v1693
        %vm1695 = vweird.f32 %v1687
        %vm1696 = vweird.f32 %v1689
        %vm1697 = vmor %vm1695, %vm1696
        %v1698 = vsel %vm1697, %v1689, %v1694
        %v1699 = vrsqrt.pop %v1688
        %v1700 = vmul.f32 %v1699, %v1688
        %v1701 = vmul.f32 %v1700, %v1699
        %v1702 = vmul.f32 0.5, %v1701
        %v1703 = vsub.f32 1.5, %v1702
        %v1704 = vmul.f32 %v1699, %v1703
        %vm1705 = vweird.f32 %v1688
        %vm1706 = vweird.f32 %v1699
        %vm1707 = vmor %vm1705, %vm1706
        %v1708 = vsel %vm1707, %v1699, %v1704
        %v1709 = vmul.f32 %v1675, %v1698
        %v1710 = vmul.f32 %v1676, %v1708
        %v1712 = vperm.slane %v1658, 0
        %v1714 = vmul.f32 %v1709, %v1712
        %v1715 = vmul.f32 %v1710, %v1712
        %v1717 = vperm.slane %v1659, 0
        %v1719 = vadd.f32 %v1714, %v1717
        %v1720 = vadd.f32 %v1715, %v1717
        %v1721 = vld [vmem:[%s985] sm:$0xf]
        %v1722 = vld [vmem:[%s985 + $0x4] sm:$0xf]
        %v1723 = vld [vmem:[%s985 + $0x8] sm:$0xf]
        %v1724 = vld [vmem:[%s985 + $0xc] sm:$0xf]
        %v1725 = vpack.c.bf16 %v1720, %v1719
        %v1726 = vld [vmem:[%s813] sm:$0x1]
        %v1728 = vperm.slane %v1726, 0
        %v1734 = vunpack.c.l.b16 %v1721
        %v1735 = vunpack.c.l.b16 %v1722
        %v1736 = vunpack.c.l.b16 %v1723
        %v1737 = vunpack.c.l.b16 %v1724
        %v1738 = vpack.c.b16 %v1735, %v1734
        %v1739 = vpack.c.b16 %v1737, %v1736
        %v1743 = vsel %vm1097, %v1725, 0
        %1745 = vmatpush.bf16.msra.mxu0 0
        %1746 = vmatpush.bf16.msra.mxu0 0
        %1747 = vmatpush.bf16.msra.mxu0 0
        %1748 = vmatpush.bf16.msra.mxu0 0
        %1749 = vmatpush.bf16.msra.mxu0 0
        %1750 = vmatpush.bf16.msra.mxu0 0
        %1751 = vmatpush.bf16.msra.mxu0 %v1739
        %1752 = vmatpush.bf16.msra.mxu0 %v1738
        %1753 = vmatmul.bf16.gmra.mxu0 %v1743
        %v1754 = vpop.f32.mrf.mxu0
        %v1755 = vadd.f32 %v1728, %v1754
        %v1756 = vpop.f32.mrf.mxu0
        %v1757 = vadd.f32 %v1728, %v1756
        %1758 = vdwg.mxu0
        %v1759 = vmul.f32 %v1755, 0.5
        %v1760 = vmul.f32 %v1757, 0.5
        %v1761 = vmul.f32 %v1755, 0.044715
        %v1762 = vmul.f32 %v1757, 0.044715
        %v1763 = vmul.f32 %v1761, %v1755
        %v1764 = vmul.f32 %v1762, %v1757
        %v1765 = vmul.f32 %v1763, %v1755
        %v1766 = vmul.f32 %v1764, %v1757
        %v1767 = vadd.f32 %v1755, %v1765
        %v1768 = vadd.f32 %v1757, %v1766
        %v1769 = vmul.f32 %v1767, 0.7978846
        %v1770 = vmul.f32 %v1768, 0.7978846
        %v1771 = vtanh.pop %v1769
        %v1772 = vtanh.pop %v1770
        %v1773 = vadd.f32 %v1771, 1.0
        %v1774 = vadd.f32 %v1772, 1.0
        %v1775 = vmul.f32 %v1759, %v1773
        %v1776 = vmul.f32 %v1760, %v1774
        %v1777 = vld [vmem:[%s990] sm:$0xf]
        %v1778 = vld [vmem:[%s990 + $0x4] sm:$0xf]
        %v1779 = vld [vmem:[%s990 + $0x8] sm:$0xf]
        %v1780 = vld [vmem:[%s990 + $0xc] sm:$0xf]
        %v1781 = vld [vmem:[%s990 + $0x10] sm:$0xf]
        %v1782 = vld [vmem:[%s990 + $0x14] sm:$0xf]
        %v1783 = vld [vmem:[%s990 + $0x18] sm:$0xf]
        %v1784 = vld [vmem:[%s990 + $0x1c] sm:$0xf]
        %v1785 = vpack.c.bf16 %v1776, %v1775
        %v1786 = vld [vmem:[%s822] sm:$0x1]
        %v1788 = vperm.slane %v1786, 0
        %v1798 = vunpack.c.l.b16 %v1777
        %v1799 = vunpack.c.l.b16 %v1778
        %v1800 = vunpack.c.l.b16 %v1779
        %v1801 = vunpack.c.l.b16 %v1780
        %v1802 = vunpack.c.l.b16 %v1781
        %v1803 = vunpack.c.l.b16 %v1782
        %v1804 = vunpack.c.l.b16 %v1783
        %v1805 = vunpack.c.l.b16 %v1784
        %v1806 = vpack.c.b16 %v1799, %v1798
        %v1807 = vpack.c.b16 %v1801, %v1800
        %v1808 = vpack.c.b16 %v1803, %v1802
        %v1809 = vpack.c.b16 %v1805, %v1804
        %vm1814 = vcmask 523264
        %v1816 = vsel %vm1814, %v1785, 0
        %1818 = vmatpush.bf16.msra.mxu0 0
        %1819 = vmatpush.bf16.msra.mxu0 0
        %1820 = vmatpush.bf16.msra.mxu0 0
        %1821 = vmatpush.bf16.msra.mxu0 0
        %1822 = vmatpush.bf16.msra.mxu0 %v1809
        %1823 = vmatpush.bf16.msra.mxu0 %v1808
        %1824 = vmatpush.bf16.msra.mxu0 %v1807
        %1825 = vmatpush.bf16.msra.mxu0 %v1806
        %1826 = vmatmul.bf16.gmra.mxu0 %v1816
        %v1827 = vpop.f32.mrf.mxu0
        %v1828 = vadd.f32 %v1788, %v1827
        %v1829 = vpop.f32.mrf.mxu0
        %v1830 = vadd.f32 %v1788, %v1829
        %1831 = vdwg.mxu0
        %v1832 = vadd.f32 %v1828, %v1719
        %v1833 = vadd.f32 %v1830, %v1720
        %v1834 = vld [vmem:[%s849] sm:$0x1]
        %v1835 = vld [vmem:[%s858] sm:$0x1]
        %v1836 = vsel %vm1097, %v1832, 0.0
        %1837 = vadd.xlane.f32.xlu0 %v1836
        %v1838 = vpop.xlane.xlu0 %1837
        %v1839 = vsel %vm1097, %v1833, 0.0
        %1840 = vadd.xlane.f32.xlu0 %v1839
        %v1841 = vpop.xlane.xlu0 %1840
        %v1842 = vmul.f32 %v1838, %v1672
        %v1843 = vmul.f32 %v1841, %v1672
        %v1844 = vsub.f32 %v1832, %v1842
        %v1845 = vsub.f32 %v1833, %v1843
        %v1846 = vmul.f32 %v1844, %v1844
        %v1847 = vmul.f32 %v1845, %v1845
        %v1848 = vsel %vm1097, %v1846, 0.0
        %1849 = vadd.xlane.f32.xlu0 %v1848
        %v1850 = vpop.xlane.xlu0 %1849
        %v1851 = vsel %vm1097, %v1847, 0.0
        %1852 = vadd.xlane.f32.xlu0 %v1851
        %v1853 = vpop.xlane.xlu0 %1852
        %v1854 = vmul.f32 %v1850, %v1672
        %v1855 = vmul.f32 %v1853, %v1672
        %v1856 = vadd.f32 %v1854, 1e-12
        %v1857 = vadd.f32 %v1855, 1e-12
        %v1858 = vrsqrt.pop %v1856
        %v1859 = vmul.f32 %v1858, %v1856
        %v1860 = vmul.f32 %v1859, %v1858
        %v1861 = vmul.f32 0.5, %v1860
        %v1862 = vsub.f32 1.5, %v1861
        %v1863 = vmul.f32 %v1858, %v1862
        %vm1864 = vweird.f32 %v1856
        %vm1865 = vweird.f32 %v1858
        %vm1866 = vmor %vm1864, %vm1865
        %v1867 = vsel %vm1866, %v1858, %v1863
        %v1868 = vrsqrt.pop %v1857
        %v1869 = vmul.f32 %v1868, %v1857
        %v1870 = vmul.f32 %v1869, %v1868
        %v1871 = vmul.f32 0.5, %v1870
        %v1872 = vsub.f32 1.5, %v1871
        %v1873 = vmul.f32 %v1868, %v1872
        %vm1874 = vweird.f32 %v1857
        %vm1875 = vweird.f32 %v1868
        %vm1876 = vmor %vm1874, %vm1875
        %v1877 = vsel %vm1876, %v1868, %v1873
        %v1878 = vmul.f32 %v1844, %v1867
        %v1879 = vmul.f32 %v1845, %v1877
        %v1881 = vperm.slane %v1834, 0
        %v1883 = vmul.f32 %v1878, %v1881
        %v1884 = vmul.f32 %v1879, %v1881
        %v1886 = vperm.slane %v1835, 0
        %v1888 = vadd.f32 %v1883, %v1886
        %v1889 = vadd.f32 %v1884, %v1886
        %1890 = vst.msk [vmem:[#allocation2] sm:$0xff] %vm1097, %v1888
        %1891 = vst.msk [vmem:[#allocation2 + $0x8] sm:$0xff] %vm1097, %v1889
        %p1892 = scmp.eq.s32.totalorder %s43, 1
        // Predicated region
        $region153: #{tpu_custom_call.1} parent=95 // pred_check
          %p1893 = pneg %p1892
        $region154: #{tpu_custom_call.1} parent=95 // pred_check_branch
          %1895 = sbr.rel (%p1893) target = $region156
        $region155: #{tpu_custom_call.1} parent=95 // pred_region
          %v1896 = vld [vmem:[#allocation19] sm:$0xf]
          %v1897 = vld [vmem:[#allocation19 + $0x4] sm:$0xf]
          %v1898 = vld [vmem:[#allocation19 + $0x8] sm:$0xf]
          %v1899 = vld [vmem:[#allocation19 + $0xc] sm:$0xf]
          %v1900 = vpack.c.bf16 %v1888, %v1888
          %v1901 = vpack.c.bf16 %v1889, %v1889
          %v1902 = vld [vmem:[#allocation20] sm:$0x1]
          %v1904 = vperm.slane %v1902, 0
          %v1908 = vunpack.c.l.b16 %v1900
          %v1909 = vunpack.c.l.b16 %v1901
          %v1910 = vrot.slane %v1909, 7
          %vm1911 = vcmask 1041409
          %v1912 = vsel %vm1911, %v1910, %v1908
          %v1913 = vpack.c.b16 %v1912, %v1912
          %v1918 = vunpack.c.l.b16 %v1896
          %v1919 = vunpack.c.l.b16 %v1897
          %v1920 = vunpack.c.l.b16 %v1898
          %v1921 = vunpack.c.l.b16 %v1899
          %v1922 = vpack.c.b16 %v1919, %v1918
          %v1923 = vpack.c.b16 %v1921, %v1920
          %v1927 = vsel %vm1097, %v1913, 0
          %1929 = vmatpush.bf16.msra.mxu0 0
          %1930 = vmatpush.bf16.msra.mxu0 0
          %1931 = vmatpush.bf16.msra.mxu0 0
          %1932 = vmatpush.bf16.msra.mxu0 0
          %1933 = vmatpush.bf16.msra.mxu0 0
          %1934 = vmatpush.bf16.msra.mxu0 0
          %1935 = vmatpush.bf16.msra.mxu0 %v1923
          %1936 = vmatpush.bf16.msra.mxu0 %v1922
          %1937 = vmatmul.bf16.gmra.mxu0 %v1927
          %v1938 = vpop.f32.mrf.mxu0
          %v1939 = vadd.f32 %v1904, %v1938
          %v1940 = vpop.f32.mrf.mxu0
          %1941 = vdwg.mxu0
          %v1942 = vtanh.pop %v1939
          %v1943 = vld [vmem:[%s18] sm:$0xf]
          %v1944 = vld [vmem:[%s18 + $0x4] sm:$0xf]
          %v1945 = vld [vmem:[%s18 + $0x8] sm:$0xf]
          %v1946 = vld [vmem:[%s18 + $0xc] sm:$0xf]
          %v1947 = vpack.c.bf16 %v1942, %v1942
          %v1948 = vld [vmem:[#allocation22] sm:$0x1]
          %v1950 = vperm.slane %v1948, 0
          %v1956 = vunpack.c.l.b16 %v1943
          %v1957 = vunpack.c.l.b16 %v1944
          %v1958 = vunpack.c.l.b16 %v1945
          %v1959 = vunpack.c.l.b16 %v1946
          %v1960 = vpack.c.b16 %v1957, %v1956
          %v1961 = vpack.c.b16 %v1959, %v1958
          %v1965 = vsel %vm1097, %v1947, 0
          %1967 = vmatpush.bf16.msra.mxu0 0
          %1968 = vmatpush.bf16.msra.mxu0 0
          %1969 = vmatpush.bf16.msra.mxu0 0
          %1970 = vmatpush.bf16.msra.mxu0 0
          %1971 = vmatpush.bf16.msra.mxu0 0
          %1972 = vmatpush.bf16.msra.mxu0 0
          %1973 = vmatpush.bf16.msra.mxu0 %v1961
          %1974 = vmatpush.bf16.msra.mxu0 %v1960
          %1975 = vmatmul.bf16.gmra.mxu0 %v1965
          %v1976 = vpop.f32.mrf.mxu0
          %v1977 = vadd.f32 %v1950, %v1976
          %v1978 = vpop.f32.mrf.mxu0
          %1979 = vdwg.mxu0
          %1980 = vst [vmem:[#allocation23] sm:$0x3] %v1977
        $region156: #{tpu_custom_call.1} parent=95 // pred_fallthru
          _
        // Predicated region
        $region157: #{tpu_custom_call.1} parent=95 // pred_check
          %p1981 = pneg %p515
        $region158: #{tpu_custom_call.1} parent=95 // pred_check_branch
          %1983 = sbr.rel (%p1981) target = $region160
        $region159: #{tpu_custom_call.1} parent=95 // pred_region
          %1985 = vsyncadd [#allocation8], 0
          %s1987 = sshll.u32 [#allocation23], 4
          %s1988 = int_to_ptr.vmem [resolvable:$true] %s1987
          %s1989 = sshll.u32 %s20, 4
          %s1990 = int_to_ptr.hbm [resolvable:$true] %s1989
          %1992 = dma.vmem_to_hbm [thread:$0]  %s1988, 32, %s1990, [#allocation8]
        $region160: #{tpu_custom_call.1} parent=95 // pred_fallthru
          _
        // Predicated region
        $region161: #{tpu_custom_call.1} parent=95 // pred_check
          %p1993 = pneg %p515
        $region162: #{tpu_custom_call.1} parent=95 // pred_check_branch
          %1995 = sbr.rel (%p1993) target = $region164
        $region163: #{tpu_custom_call.1} parent=95 // pred_region
          %1997 = dma.done [#allocation8], 32
        $region164: #{tpu_custom_call.1} parent=95 // pred_fallthru
          _
      $region96: #{tpu_custom_call.1} parent=5 // pred_fallthru
        _
      %p1998 = scmp.le.s32.totalorder 2, %s38
      // Predicated region
      $region165: #{tpu_custom_call.1} parent=5 // pred_check
        %p1999 = pneg %p1998
      $region166: #{tpu_custom_call.1} parent=5 // pred_check_branch
        %2001 = sbr.rel (%p1999) target = $region168
      $region167: #{tpu_custom_call.1} parent=5 // pred_region
        %s2002 = ssub.s32 %s38, 2
      $region168: #{tpu_custom_call.1} parent=5 // pred_fallthru
        _
    $region6: #{tpu_custom_call.1} parent=1 // loop_footer
      %s42 = sadd.s32 1, %s38
    $region7: #{tpu_custom_call.1} parent=1 // loop_footer_branch
      %37 = sbr.rel target = $region3
    $region8: #{tpu_custom_call.1} parent=1 // loop_exit
      _
    %2003 = vsyncpa [#allocation7], 1
    %s2004 = scalar_lea.sflag [#allocation7], 1
    %2005 = vsyncpa %s2004, 1
    %2006 = vsyncpa [#allocation10], 1
    %2007 = vsyncpa [#allocation21], 1
    %2008 = vsyncpa [#allocation8], 1
    %s2009 = scalar_lea.sflag [#allocation8], 1
    %2010 = vsyncpa %s2009, 1

</llo_original>
